<compile_context>
chip_gen: v5e
topology: v5e:2x2
jax: 0.10.0
libtpu: 0.0.40
codegen_flags: <defaults>
</compile_context>

<pallas_src>
import numpy as np
import jax
import jax.numpy as jnp
from jax import lax
from jax.experimental import pallas as pl
from jax.experimental.pallas import tpu as pltpu

PATCH = 3   # patch_size_list=[3]
PROP = 3    # propagate_size_list=[3]
# stride_list=[1], num_of_modules = 1


# ------------------------------- Pallas kernel ------------------------------

def _make_kernel(P, C, nc_out, W, H, patch):
    K2 = patch * patch
    D = K2 * C
    D_pad = ((D + 15) // 16) * 16          # bf16/f32 sublane-tile friendly (48)
    pad = patch // 2
    f32 = jnp.float32
    bf16 = jnp.bfloat16
    inv_k2 = 1.0 / float(K2)

    def kernel(fg_ref, mask_ref, coords_ref, wslab_ref, out_ref, fpb_scr, kn_scr):
        fg = fg_ref[0]                       # (C, P)  lane-dense pixel map
        msk = mask_ref[0]                    # (1, P)
        coords = coords_ref[...]             # (2, P) int32
        qi = coords[0:1, :]                  # spatial row index of each lane
        qj = coords[1:2, :]                  # spatial col index of each lane

        bg = fg * msk                        # background = foreground * mask

        # validity masks: is pixel (i+di, j+dj) inside the W x H image?
        valid = {}
        for di in range(-pad, pad + 1):
            for dj in range(-pad, pad + 1):
                valid[(di, dj)] = (((qi + di) >= 0) & ((qi + di) <= W - 1) &
                                   ((qj + dj) >= 0) & ((qj + dj) <= H - 1)
                                   ).astype(f32)

        # zero the sublane padding rows so they never contribute to dots / norms
        if D_pad > D:
            zpad = jnp.zeros((D_pad - D, P), f32)
            fpb_scr[pl.ds(D, D_pad - D), :] = zpad
            kn_scr[pl.ds(D, D_pad - D), :] = zpad

        # --- in-kernel im2col: 9 masked lane-rolls of fg / bg -> (D_pad, P) ---
        for ki in range(patch):
            for kj in range(patch):
                k = ki * patch + kj
                di, dj = ki - pad, kj - pad
                off = di * H + dj
                sv = valid[(di, dj)]
                if off == 0:
                    fg_s, bg_s = fg, bg
                else:
                    sh = (-off) % P
                    fg_s = pltpu.roll(fg, sh, axis=1)
                    bg_s = pltpu.roll(bg, sh, axis=1)
                fpb_scr[pl.ds(k * C, C), :] = fg_s * sv          # fg patches
                kn_scr[pl.ds(k * C, C), :] = bg_s * sv + 1e-7    # bg patches (+eps)

        # --- 3x3 all-ones propagation, folded onto the small patch matrix ---
        # (box filter acts only on the non-contracted query axis, so it commutes
        #  through the correlation matmul)
        fp = fpb_scr[...]                                         # (D_pad, P)
        t = fp
        t = t + pltpu.roll(fp, 1, axis=1) * valid[(0, -1)]
        t = t + pltpu.roll(fp, (P - 1) % P, axis=1) * valid[(0, 1)]
        fpbox = t
        fpbox = fpbox + pltpu.roll(t, H % P, axis=1) * valid[(-1, 0)]
        fpbox = fpbox + pltpu.roll(t, (P - H) % P, axis=1) * valid[(1, 0)]

        # --- L2-normalized background patch kernels -------------------------
        knp = kn_scr[...]                                         # (D_pad, P)
        inv_norm = lax.rsqrt(jnp.sum(knp * knp, axis=0, keepdims=True))
        knD = knp * inv_norm                                      # (D_pad, L=P)

        # --- correlation + propagation: ONE MXU matmul (bf16 ops, f32 acc) ---
        logits = jnp.dot(knD.T.astype(bf16), fpbox.astype(bf16),
                         preferred_element_type=f32)              # (L, P)

        # --- softmax over the patch-index (sublane) axis ---------------------
        m = jnp.max(logits, axis=0, keepdims=True)                # (1, P)
        e = jnp.exp(logits - m)
        s = jnp.sum(e, axis=0, keepdims=True)
        inv_s = pl.reciprocal(s, approx=True) * inv_k2            # fold 1/patch^2

        # --- fused reconstruction: one (D_pad, L)@(L, P) matmul on raw e ------
        # softmax denominator applied as a column scale BEFORE the col2im rolls
        recs = jnp.dot(knD.astype(bf16), e.astype(bf16),
                       preferred_element_type=f32) * inv_s        # (D_pad, P)

        # --- conv_transpose2d (col2im): 9 masked lane-rolls of (C,P) slices ---
        rec = jnp.zeros((C, P), f32)
        for ki in range(patch):
            for kj in range(patch):
                k = ki * patch + kj
                di, dj = ki - pad, kj - pad
                u = recs[k * C:(k + 1) * C, :]                    # (C, P)
                off = di * H + dj
                if off != 0:
                    u = pltpu.roll(u, off % P, axis=1)
                if di != 0 or dj != 0:
                    u = u * valid[(-di, -dj)]
                rec = rec + u

        final = rec * (1.0 - msk) + fg * msk                      # (C, P)

        # --- SEModule: GAP + Linear/ReLU/Linear/Sigmoid gate ------------------
        ws = wslab_ref[...]                                       # packed weights
        w1t = ws[0:C, 0:C]                                        # w1^T
        w2 = ws[C:2 * C, 0:C]
        b2 = ws[C:2 * C, C:C + 1]                                 # (C, 1)
        wc = ws[2 * C:2 * C + nc_out, 0:C]                        # (nc, C)
        bc = ws[2 * C:2 * C + nc_out, C:C + 1]                    # (nc, 1)
        b1 = ws[2 * C + nc_out:2 * C + nc_out + 1, 0:C]           # (1, C)

        pooled = jnp.mean(final, axis=1, keepdims=True)           # (C, 1)
        h1 = jnp.maximum(jnp.sum(w1t * pooled, axis=0, keepdims=True) + b1, 0.0)
        g = jnp.sum(w2 * h1, axis=1, keepdims=True) + b2          # (C, 1)
        gate = jax.nn.sigmoid(g)
        scaled = final * gate                                     # (C, P)

        # --- 1x1 combiner on the VPU (M=K=4 would waste an MXU round trip) ---
        out = jnp.zeros((nc_out, P), f32)
        for c in range(C):
            out = out + wc[:, c:c + 1] * scaled[c:c + 1, :]
        out = out + bc
        out_ref[0] = out.astype(out_ref.dtype)

    return kernel, D_pad


def parallel_contextual_attention(fg, mask, params, patch=PATCH):
    """fg: (B, C, W, H) NCHW, mask: (B, 1, W, H). Returns (B, nc_out, W, H)."""
    bz, nc, w, h = fg.shape
    C = nc                                   # num_of_modules == 1
    nc_out = params["wc"].shape[0]
    P = w * h

    fg_flat = fg.reshape(bz, C, P).astype(jnp.float32)
    mask_flat = mask.reshape(bz, 1, P).astype(jnp.float32)

    # spatial (row, col) index of each lane position p = i*h + j
    ii = np.repeat(np.arange(w, dtype=np.int32), h)
    jj = np.tile(np.arange(h, dtype=np.int32), w)
    coords = jnp.asarray(np.stack([ii, jj], 0))                   # (2, P) int32

    # one small packed weight slab: [w1^T ; w2|b2 ; wc|bc ; b1]
    rows = 2 * C + nc_out + 1
    wslab = jnp.zeros((rows, C + 1), jnp.float32)
    wslab = wslab.at[0:C, 0:C].set(params["w1"].T)
    wslab = wslab.at[C:2 * C, 0:C].set(params["w2"])
    wslab = wslab.at[C:2 * C, C].set(params["b2"])
    wslab = wslab.at[2 * C:2 * C + nc_out, 0:C].set(params["wc"])
    wslab = wslab.at[2 * C:2 * C + nc_out, C].set(params["bc"])
    wslab = wslab.at[2 * C + nc_out, 0:C].set(params["b1"])

    kernel, D_pad = _make_kernel(P, C, nc_out, w, h, patch)

    grid_spec = pltpu.PrefetchScalarGridSpec(
        num_scalar_prefetch=0,
        grid=(bz,),
        in_specs=[
            pl.BlockSpec((1, C, P), lambda b: (b, 0, 0)),          # fg (C, P)
            pl.BlockSpec((1, 1, P), lambda b: (b, 0, 0)),          # mask (1, P)
            pl.BlockSpec((2, P), lambda b: (0, 0)),                # coords
            pl.BlockSpec((rows, C + 1), lambda b: (0, 0)),         # packed weights
        ],
        out_specs=pl.BlockSpec((1, nc_out, P), lambda b: (b, 0, 0)),
        scratch_shapes=[
            pltpu.VMEM((D_pad, P), jnp.float32),                   # fg patches / box
            pltpu.VMEM((D_pad, P), jnp.float32),                   # bg patches
        ],
    )

    out_flat = pl.pallas_call(
        kernel,
        out_shape=jax.ShapeDtypeStruct((bz, nc_out, P), jnp.float32),
        grid_spec=grid_spec,
        compiler_params=pltpu.CompilerParams(
            dimension_semantics=("parallel",)),
    )(fg_flat, mask_flat, coords, wslab)

    # output is channel-major and lane-dense: plain reshape back to NCHW
    return out_flat.reshape(bz, nc_out, w, h)


# --------------------------- pure-JAX reference ------------------------------

def _extract_patches_nchw(x_chw, patch):
    """(C, W, H) -> (W*H, C, patch, patch); matches torch unfold-based patches."""
    c, w, h = x_chw.shape
    pad = patch // 2
    xp = jnp.pad(x_chw, ((0, 0), (pad, pad), (pad, pad)))
    rows = []
    for ki in range(patch):
        for kj in range(patch):
            rows.append(xp[:, ki:ki + w, kj:kj + h])
    p = jnp.stack(rows, 0).reshape(patch, patch, c, w, h)
    p = jnp.transpose(p, (3, 4, 2, 0, 1)).reshape(w * h, c, patch, patch)
    return p


def reference_forward(fg, mask, params, patch=PATCH, prop=PROP):
    bz, nc, w, h = fg.shape
    pad = patch // 2
    hp = lax.Precision.HIGHEST
    bg = fg * mask
    outs = []
    for b in range(bz):
        K = _extract_patches_nchw(bg[b], patch) + 1e-7               # (L,nc,p,p)
        K = K / jnp.sqrt(jnp.sum(K * K, axis=(1, 2, 3), keepdims=True))
        fm = fg[b:b + 1]
        conv = lax.conv_general_dilated(
            fm, K, (1, 1), ((pad, pad), (pad, pad)),
            dimension_numbers=("NCHW", "OIHW", "NCHW"), precision=hp)
        L = w * h
        ones_k = jnp.ones((L, 1, prop, prop), jnp.float32)
        conv = lax.conv_general_dilated(
            conv, ones_k, (1, 1), ((1, 1), (1, 1)),
            dimension_numbers=("NCHW", "OIHW", "NCHW"),
            feature_group_count=L, precision=hp)
        attn = jax.nn.softmax(conv, axis=1)
        Kt = jnp.transpose(jnp.flip(K, axis=(2, 3)), (1, 0, 2, 3))   # (nc,L,p,p)
        rec = lax.conv_general_dilated(
            attn, Kt, (1, 1), ((pad, pad), (pad, pad)),
            dimension_numbers=("NCHW", "OIHW", "NCHW"), precision=hp)
        rec = rec * (1.0 - mask[b:b + 1]) / (patch * patch)
        outs.append(rec + fm * mask[b:b + 1])
    x = jnp.concatenate(outs, axis=0)                                 # (B,C,w,h)
    pooled = jnp.mean(x, axis=(2, 3))                                 # (B,C)
    h1 = jax.nn.relu(jnp.dot(pooled, params["w1"].T, precision=hp) + params["b1"])
    g = jax.nn.sigmoid(jnp.dot(h1, params["w2"].T, precision=hp) + params["b2"])
    x = x * g[:, :, None, None]
    out = jnp.einsum("bchw,oc->bohw", x, params["wc"], precision=hp)
    return out + params["bc"][None, :, None, None]


def init_params(key, nc, num_modules=1):
    C = nc * num_modules
    ks = jax.random.split(key, 6)
    return dict(
        w1=jax.random.normal(ks[0], (C, C), jnp.float32) * 0.4,
        b1=jax.random.normal(ks[1], (C,), jnp.float32) * 0.1,
        w2=jax.random.normal(ks[2], (C, C), jnp.float32) * 0.4,
        b2=jax.random.normal(ks[3], (C,), jnp.float32) * 0.1,
        wc=jax.random.normal(ks[4], (nc, C), jnp.float32) * 0.4,   # 1x1 conv weight
        bc=jax.random.normal(ks[5], (nc,), jnp.float32) * 0.1,
    )


if __name__ == "__main__":
    bz, nc, w, h = 2, 4, 16, 16
    key = jax.random.PRNGKey(0)
    kx, km, kp = jax.random.split(key, 3)
    foreground = jax.random.normal(kx, (bz, nc, w, h), jnp.float32)
    mask = (jax.random.uniform(km, (bz, 1, w, h)) > 0.5).astype(jnp.float32)
    params = init_params(kp, nc)

    fwd = jax.jit(lambda f, m: parallel_contextual_attention(f, m, params))
    out = jax.block_until_ready(fwd(foreground, mask))

    ref = jax.block_until_ready(
        jax.jit(lambda f, m: reference_forward(f, m, params))(foreground, mask))

    # bf16 MXU operands (perf-review item) + approx softmax reciprocal add
    # ~1e-2-scale absolute noise vs the f32 HIGHEST-precision reference, so the
    # absolute tolerance is 3e-2 (relative accuracy kept at 2e-2).
    if not np.allclose(np.asarray(out), np.asarray(ref), rtol=2e-2, atol=3e-2):
        err = float(np.max(np.abs(np.asarray(out) - np.asarray(ref))))
        raise AssertionError(f"Pallas kernel mismatch vs JAX reference, max|err|={err}")

    print("KERNEL_OK")
</pallas_src>

<mosaic_0001>
module attributes {stable_mosaic.version = 11 : i64} {
  func.func @kernel(%arg0: i32, %arg1: memref<1x4x256xf32, #tpu.memory_space<vmem>>, %arg2: memref<1x1x256xf32, #tpu.memory_space<vmem>>, %arg3: memref<2x256xi32, #tpu.memory_space<vmem>>, %arg4: memref<13x5xf32, #tpu.memory_space<vmem>>, %arg5: memref<1x4x256xf32, #tpu.memory_space<vmem>>, %arg6: memref<48x256xf32, #tpu.memory_space<vmem>>, %arg7: memref<48x256xf32, #tpu.memory_space<vmem>>) attributes {dimension_semantics = [#tpu.dimension_semantics<parallel>], iteration_bounds = array<i64: 2>, scalar_prefetch = 0 : i64, scratch_operands = 2 : i64, tpu.core_type = #tpu.core_type<tc>, window_params = [{transform_indices = @transform_0, window_bounds = array<i64: 1, 4, 256>}, {transform_indices = @transform_1, window_bounds = array<i64: 1, 1, 256>}, {pipeline_mode = #tpu.pipeline_mode<synchronous>, transform_indices = @transform_2, window_bounds = array<i64: 2, 256>}, {pipeline_mode = #tpu.pipeline_mode<synchronous>, transform_indices = @transform_3, window_bounds = array<i64: 13, 5>}, {transform_indices = @transform_4, window_bounds = array<i64: 1, 4, 256>}]} {
    %c0 = arith.constant 0 : index
    %c0_0 = arith.constant 0 : index
    %c0_1 = arith.constant 0 : index
    %0 = vector.load %arg1[%c0, %c0_0, %c0_1] : memref<1x4x256xf32, #tpu.memory_space<vmem>>, vector<1x4x256xf32>
    %1 = vector.shape_cast %0 : vector<1x4x256xf32> to vector<4x256xf32>
    %c0_2 = arith.constant 0 : index
    %c0_3 = arith.constant 0 : index
    %c0_4 = arith.constant 0 : index
    %2 = vector.load %arg2[%c0_2, %c0_3, %c0_4] : memref<1x1x256xf32, #tpu.memory_space<vmem>>, vector<1x1x256xf32>
    %3 = vector.shape_cast %2 : vector<1x1x256xf32> to vector<1x256xf32>
    %c0_5 = arith.constant 0 : index
    %c0_6 = arith.constant 0 : index
    %4 = vector.load %arg3[%c0_5, %c0_6] : memref<2x256xi32, #tpu.memory_space<vmem>>, vector<2x256xi32>
    %5 = vector.extract_strided_slice %4 {offsets = [0, 0], sizes = [1, 256], strides = [1, 1]} : vector<2x256xi32> to vector<1x256xi32>
    %6 = vector.extract_strided_slice %4 {offsets = [1, 0], sizes = [1, 256], strides = [1, 1]} : vector<2x256xi32> to vector<1x256xi32>
    %7 = vector.broadcast %3 : vector<1x256xf32> to vector<4x256xf32>
    %8 = arith.mulf %1, %7 : vector<4x256xf32>
    %c-1_i32 = arith.constant -1 : i32
    %9 = vector.broadcast %c-1_i32 : i32 to vector<1x256xi32>
    %10 = arith.addi %5, %9 : vector<1x256xi32>
    %c0_i32 = arith.constant 0 : i32
    %11 = vector.broadcast %c0_i32 : i32 to vector<1x256xi32>
    %12 = arith.cmpi sge, %10, %11 : vector<1x256xi32>
    %c-1_i32_7 = arith.constant -1 : i32
    %13 = vector.broadcast %c-1_i32_7 : i32 to vector<1x256xi32>
    %14 = arith.addi %5, %13 : vector<1x256xi32>
    %c15_i32 = arith.constant 15 : i32
    %15 = vector.broadcast %c15_i32 : i32 to vector<1x256xi32>
    %16 = arith.cmpi sle, %14, %15 : vector<1x256xi32>
    %17 = arith.andi %12, %16 : vector<1x256xi1>
    %c-1_i32_8 = arith.constant -1 : i32
    %18 = vector.broadcast %c-1_i32_8 : i32 to vector<1x256xi32>
    %19 = arith.addi %6, %18 : vector<1x256xi32>
    %c0_i32_9 = arith.constant 0 : i32
    %20 = vector.broadcast %c0_i32_9 : i32 to vector<1x256xi32>
    %21 = arith.cmpi sge, %19, %20 : vector<1x256xi32>
    %22 = arith.andi %17, %21 : vector<1x256xi1>
    %c-1_i32_10 = arith.constant -1 : i32
    %23 = vector.broadcast %c-1_i32_10 : i32 to vector<1x256xi32>
    %24 = arith.addi %6, %23 : vector<1x256xi32>
    %c15_i32_11 = arith.constant 15 : i32
    %25 = vector.broadcast %c15_i32_11 : i32 to vector<1x256xi32>
    %26 = arith.cmpi sle, %24, %25 : vector<1x256xi32>
    %27 = arith.andi %22, %26 : vector<1x256xi1>
    %28 = arith.extui %27 : vector<1x256xi1> to vector<1x256xi32>
    %29 = arith.sitofp %28 : vector<1x256xi32> to vector<1x256xf32>
    %c-1_i32_12 = arith.constant -1 : i32
    %30 = vector.broadcast %c-1_i32_12 : i32 to vector<1x256xi32>
    %31 = arith.addi %5, %30 : vector<1x256xi32>
    %c0_i32_13 = arith.constant 0 : i32
    %32 = vector.broadcast %c0_i32_13 : i32 to vector<1x256xi32>
    %33 = arith.cmpi sge, %31, %32 : vector<1x256xi32>
    %c-1_i32_14 = arith.constant -1 : i32
    %34 = vector.broadcast %c-1_i32_14 : i32 to vector<1x256xi32>
    %35 = arith.addi %5, %34 : vector<1x256xi32>
    %c15_i32_15 = arith.constant 15 : i32
    %36 = vector.broadcast %c15_i32_15 : i32 to vector<1x256xi32>
    %37 = arith.cmpi sle, %35, %36 : vector<1x256xi32>
    %38 = arith.andi %33, %37 : vector<1x256xi1>
    %c0_i32_16 = arith.constant 0 : i32
    %39 = vector.broadcast %c0_i32_16 : i32 to vector<1x256xi32>
    %40 = arith.addi %6, %39 : vector<1x256xi32>
    %c0_i32_17 = arith.constant 0 : i32
    %41 = vector.broadcast %c0_i32_17 : i32 to vector<1x256xi32>
    %42 = arith.cmpi sge, %40, %41 : vector<1x256xi32>
    %43 = arith.andi %38, %42 : vector<1x256xi1>
    %c0_i32_18 = arith.constant 0 : i32
    %44 = vector.broadcast %c0_i32_18 : i32 to vector<1x256xi32>
    %45 = arith.addi %6, %44 : vector<1x256xi32>
    %c15_i32_19 = arith.constant 15 : i32
    %46 = vector.broadcast %c15_i32_19 : i32 to vector<1x256xi32>
    %47 = arith.cmpi sle, %45, %46 : vector<1x256xi32>
    %48 = arith.andi %43, %47 : vector<1x256xi1>
    %49 = arith.extui %48 : vector<1x256xi1> to vector<1x256xi32>
    %50 = arith.sitofp %49 : vector<1x256xi32> to vector<1x256xf32>
    %c-1_i32_20 = arith.constant -1 : i32
    %51 = vector.broadcast %c-1_i32_20 : i32 to vector<1x256xi32>
    %52 = arith.addi %5, %51 : vector<1x256xi32>
    %c0_i32_21 = arith.constant 0 : i32
    %53 = vector.broadcast %c0_i32_21 : i32 to vector<1x256xi32>
    %54 = arith.cmpi sge, %52, %53 : vector<1x256xi32>
    %c-1_i32_22 = arith.constant -1 : i32
    %55 = vector.broadcast %c-1_i32_22 : i32 to vector<1x256xi32>
    %56 = arith.addi %5, %55 : vector<1x256xi32>
    %c15_i32_23 = arith.constant 15 : i32
    %57 = vector.broadcast %c15_i32_23 : i32 to vector<1x256xi32>
    %58 = arith.cmpi sle, %56, %57 : vector<1x256xi32>
    %59 = arith.andi %54, %58 : vector<1x256xi1>
    %c1_i32 = arith.constant 1 : i32
    %60 = vector.broadcast %c1_i32 : i32 to vector<1x256xi32>
    %61 = arith.addi %6, %60 : vector<1x256xi32>
    %c0_i32_24 = arith.constant 0 : i32
    %62 = vector.broadcast %c0_i32_24 : i32 to vector<1x256xi32>
    %63 = arith.cmpi sge, %61, %62 : vector<1x256xi32>
    %64 = arith.andi %59, %63 : vector<1x256xi1>
    %c1_i32_25 = arith.constant 1 : i32
    %65 = vector.broadcast %c1_i32_25 : i32 to vector<1x256xi32>
    %66 = arith.addi %6, %65 : vector<1x256xi32>
    %c15_i32_26 = arith.constant 15 : i32
    %67 = vector.broadcast %c15_i32_26 : i32 to vector<1x256xi32>
    %68 = arith.cmpi sle, %66, %67 : vector<1x256xi32>
    %69 = arith.andi %64, %68 : vector<1x256xi1>
    %70 = arith.extui %69 : vector<1x256xi1> to vector<1x256xi32>
    %71 = arith.sitofp %70 : vector<1x256xi32> to vector<1x256xf32>
    %c0_i32_27 = arith.constant 0 : i32
    %72 = vector.broadcast %c0_i32_27 : i32 to vector<1x256xi32>
    %73 = arith.addi %5, %72 : vector<1x256xi32>
    %c0_i32_28 = arith.constant 0 : i32
    %74 = vector.broadcast %c0_i32_28 : i32 to vector<1x256xi32>
    %75 = arith.cmpi sge, %73, %74 : vector<1x256xi32>
    %c0_i32_29 = arith.constant 0 : i32
    %76 = vector.broadcast %c0_i32_29 : i32 to vector<1x256xi32>
    %77 = arith.addi %5, %76 : vector<1x256xi32>
    %c15_i32_30 = arith.constant 15 : i32
    %78 = vector.broadcast %c15_i32_30 : i32 to vector<1x256xi32>
    %79 = arith.cmpi sle, %77, %78 : vector<1x256xi32>
    %80 = arith.andi %75, %79 : vector<1x256xi1>
    %c-1_i32_31 = arith.constant -1 : i32
    %81 = vector.broadcast %c-1_i32_31 : i32 to vector<1x256xi32>
    %82 = arith.addi %6, %81 : vector<1x256xi32>
    %c0_i32_32 = arith.constant 0 : i32
    %83 = vector.broadcast %c0_i32_32 : i32 to vector<1x256xi32>
    %84 = arith.cmpi sge, %82, %83 : vector<1x256xi32>
    %85 = arith.andi %80, %84 : vector<1x256xi1>
    %c-1_i32_33 = arith.constant -1 : i32
    %86 = vector.broadcast %c-1_i32_33 : i32 to vector<1x256xi32>
    %87 = arith.addi %6, %86 : vector<1x256xi32>
    %c15_i32_34 = arith.constant 15 : i32
    %88 = vector.broadcast %c15_i32_34 : i32 to vector<1x256xi32>
    %89 = arith.cmpi sle, %87, %88 : vector<1x256xi32>
    %90 = arith.andi %85, %89 : vector<1x256xi1>
    %91 = arith.extui %90 : vector<1x256xi1> to vector<1x256xi32>
    %92 = arith.sitofp %91 : vector<1x256xi32> to vector<1x256xf32>
    %c0_i32_35 = arith.constant 0 : i32
    %93 = vector.broadcast %c0_i32_35 : i32 to vector<1x256xi32>
    %94 = arith.addi %5, %93 : vector<1x256xi32>
    %c0_i32_36 = arith.constant 0 : i32
    %95 = vector.broadcast %c0_i32_36 : i32 to vector<1x256xi32>
    %96 = arith.cmpi sge, %94, %95 : vector<1x256xi32>
    %c0_i32_37 = arith.constant 0 : i32
    %97 = vector.broadcast %c0_i32_37 : i32 to vector<1x256xi32>
    %98 = arith.addi %5, %97 : vector<1x256xi32>
    %c15_i32_38 = arith.constant 15 : i32
    %99 = vector.broadcast %c15_i32_38 : i32 to vector<1x256xi32>
    %100 = arith.cmpi sle, %98, %99 : vector<1x256xi32>
    %101 = arith.andi %96, %100 : vector<1x256xi1>
    %c0_i32_39 = arith.constant 0 : i32
    %102 = vector.broadcast %c0_i32_39 : i32 to vector<1x256xi32>
    %103 = arith.addi %6, %102 : vector<1x256xi32>
    %c0_i32_40 = arith.constant 0 : i32
    %104 = vector.broadcast %c0_i32_40 : i32 to vector<1x256xi32>
    %105 = arith.cmpi sge, %103, %104 : vector<1x256xi32>
    %106 = arith.andi %101, %105 : vector<1x256xi1>
    %c0_i32_41 = arith.constant 0 : i32
    %107 = vector.broadcast %c0_i32_41 : i32 to vector<1x256xi32>
    %108 = arith.addi %6, %107 : vector<1x256xi32>
    %c15_i32_42 = arith.constant 15 : i32
    %109 = vector.broadcast %c15_i32_42 : i32 to vector<1x256xi32>
    %110 = arith.cmpi sle, %108, %109 : vector<1x256xi32>
    %111 = arith.andi %106, %110 : vector<1x256xi1>
    %112 = arith.extui %111 : vector<1x256xi1> to vector<1x256xi32>
    %113 = arith.sitofp %112 : vector<1x256xi32> to vector<1x256xf32>
    %c0_i32_43 = arith.constant 0 : i32
    %114 = vector.broadcast %c0_i32_43 : i32 to vector<1x256xi32>
    %115 = arith.addi %5, %114 : vector<1x256xi32>
    %c0_i32_44 = arith.constant 0 : i32
    %116 = vector.broadcast %c0_i32_44 : i32 to vector<1x256xi32>
    %117 = arith.cmpi sge, %115, %116 : vector<1x256xi32>
    %c0_i32_45 = arith.constant 0 : i32
    %118 = vector.broadcast %c0_i32_45 : i32 to vector<1x256xi32>
    %119 = arith.addi %5, %118 : vector<1x256xi32>
    %c15_i32_46 = arith.constant 15 : i32
    %120 = vector.broadcast %c15_i32_46 : i32 to vector<1x256xi32>
    %121 = arith.cmpi sle, %119, %120 : vector<1x256xi32>
    %122 = arith.andi %117, %121 : vector<1x256xi1>
    %c1_i32_47 = arith.constant 1 : i32
    %123 = vector.broadcast %c1_i32_47 : i32 to vector<1x256xi32>
    %124 = arith.addi %6, %123 : vector<1x256xi32>
    %c0_i32_48 = arith.constant 0 : i32
    %125 = vector.broadcast %c0_i32_48 : i32 to vector<1x256xi32>
    %126 = arith.cmpi sge, %124, %125 : vector<1x256xi32>
    %127 = arith.andi %122, %126 : vector<1x256xi1>
    %c1_i32_49 = arith.constant 1 : i32
    %128 = vector.broadcast %c1_i32_49 : i32 to vector<1x256xi32>
    %129 = arith.addi %6, %128 : vector<1x256xi32>
    %c15_i32_50 = arith.constant 15 : i32
    %130 = vector.broadcast %c15_i32_50 : i32 to vector<1x256xi32>
    %131 = arith.cmpi sle, %129, %130 : vector<1x256xi32>
    %132 = arith.andi %127, %131 : vector<1x256xi1>
    %133 = arith.extui %132 : vector<1x256xi1> to vector<1x256xi32>
    %134 = arith.sitofp %133 : vector<1x256xi32> to vector<1x256xf32>
    %c1_i32_51 = arith.constant 1 : i32
    %135 = vector.broadcast %c1_i32_51 : i32 to vector<1x256xi32>
    %136 = arith.addi %5, %135 : vector<1x256xi32>
    %c0_i32_52 = arith.constant 0 : i32
    %137 = vector.broadcast %c0_i32_52 : i32 to vector<1x256xi32>
    %138 = arith.cmpi sge, %136, %137 : vector<1x256xi32>
    %c1_i32_53 = arith.constant 1 : i32
    %139 = vector.broadcast %c1_i32_53 : i32 to vector<1x256xi32>
    %140 = arith.addi %5, %139 : vector<1x256xi32>
    %c15_i32_54 = arith.constant 15 : i32
    %141 = vector.broadcast %c15_i32_54 : i32 to vector<1x256xi32>
    %142 = arith.cmpi sle, %140, %141 : vector<1x256xi32>
    %143 = arith.andi %138, %142 : vector<1x256xi1>
    %c-1_i32_55 = arith.constant -1 : i32
    %144 = vector.broadcast %c-1_i32_55 : i32 to vector<1x256xi32>
    %145 = arith.addi %6, %144 : vector<1x256xi32>
    %c0_i32_56 = arith.constant 0 : i32
    %146 = vector.broadcast %c0_i32_56 : i32 to vector<1x256xi32>
    %147 = arith.cmpi sge, %145, %146 : vector<1x256xi32>
    %148 = arith.andi %143, %147 : vector<1x256xi1>
    %c-1_i32_57 = arith.constant -1 : i32
    %149 = vector.broadcast %c-1_i32_57 : i32 to vector<1x256xi32>
    %150 = arith.addi %6, %149 : vector<1x256xi32>
    %c15_i32_58 = arith.constant 15 : i32
    %151 = vector.broadcast %c15_i32_58 : i32 to vector<1x256xi32>
    %152 = arith.cmpi sle, %150, %151 : vector<1x256xi32>
    %153 = arith.andi %148, %152 : vector<1x256xi1>
    %154 = arith.extui %153 : vector<1x256xi1> to vector<1x256xi32>
    %155 = arith.sitofp %154 : vector<1x256xi32> to vector<1x256xf32>
    %c1_i32_59 = arith.constant 1 : i32
    %156 = vector.broadcast %c1_i32_59 : i32 to vector<1x256xi32>
    %157 = arith.addi %5, %156 : vector<1x256xi32>
    %c0_i32_60 = arith.constant 0 : i32
    %158 = vector.broadcast %c0_i32_60 : i32 to vector<1x256xi32>
    %159 = arith.cmpi sge, %157, %158 : vector<1x256xi32>
    %c1_i32_61 = arith.constant 1 : i32
    %160 = vector.broadcast %c1_i32_61 : i32 to vector<1x256xi32>
    %161 = arith.addi %5, %160 : vector<1x256xi32>
    %c15_i32_62 = arith.constant 15 : i32
    %162 = vector.broadcast %c15_i32_62 : i32 to vector<1x256xi32>
    %163 = arith.cmpi sle, %161, %162 : vector<1x256xi32>
    %164 = arith.andi %159, %163 : vector<1x256xi1>
    %c0_i32_63 = arith.constant 0 : i32
    %165 = vector.broadcast %c0_i32_63 : i32 to vector<1x256xi32>
    %166 = arith.addi %6, %165 : vector<1x256xi32>
    %c0_i32_64 = arith.constant 0 : i32
    %167 = vector.broadcast %c0_i32_64 : i32 to vector<1x256xi32>
    %168 = arith.cmpi sge, %166, %167 : vector<1x256xi32>
    %169 = arith.andi %164, %168 : vector<1x256xi1>
    %c0_i32_65 = arith.constant 0 : i32
    %170 = vector.broadcast %c0_i32_65 : i32 to vector<1x256xi32>
    %171 = arith.addi %6, %170 : vector<1x256xi32>
    %c15_i32_66 = arith.constant 15 : i32
    %172 = vector.broadcast %c15_i32_66 : i32 to vector<1x256xi32>
    %173 = arith.cmpi sle, %171, %172 : vector<1x256xi32>
    %174 = arith.andi %169, %173 : vector<1x256xi1>
    %175 = arith.extui %174 : vector<1x256xi1> to vector<1x256xi32>
    %176 = arith.sitofp %175 : vector<1x256xi32> to vector<1x256xf32>
    %c1_i32_67 = arith.constant 1 : i32
    %177 = vector.broadcast %c1_i32_67 : i32 to vector<1x256xi32>
    %178 = arith.addi %5, %177 : vector<1x256xi32>
    %c0_i32_68 = arith.constant 0 : i32
    %179 = vector.broadcast %c0_i32_68 : i32 to vector<1x256xi32>
    %180 = arith.cmpi sge, %178, %179 : vector<1x256xi32>
    %c1_i32_69 = arith.constant 1 : i32
    %181 = vector.broadcast %c1_i32_69 : i32 to vector<1x256xi32>
    %182 = arith.addi %5, %181 : vector<1x256xi32>
    %c15_i32_70 = arith.constant 15 : i32
    %183 = vector.broadcast %c15_i32_70 : i32 to vector<1x256xi32>
    %184 = arith.cmpi sle, %182, %183 : vector<1x256xi32>
    %185 = arith.andi %180, %184 : vector<1x256xi1>
    %c1_i32_71 = arith.constant 1 : i32
    %186 = vector.broadcast %c1_i32_71 : i32 to vector<1x256xi32>
    %187 = arith.addi %6, %186 : vector<1x256xi32>
    %c0_i32_72 = arith.constant 0 : i32
    %188 = vector.broadcast %c0_i32_72 : i32 to vector<1x256xi32>
    %189 = arith.cmpi sge, %187, %188 : vector<1x256xi32>
    %190 = arith.andi %185, %189 : vector<1x256xi1>
    %c1_i32_73 = arith.constant 1 : i32
    %191 = vector.broadcast %c1_i32_73 : i32 to vector<1x256xi32>
    %192 = arith.addi %6, %191 : vector<1x256xi32>
    %c15_i32_74 = arith.constant 15 : i32
    %193 = vector.broadcast %c15_i32_74 : i32 to vector<1x256xi32>
    %194 = arith.cmpi sle, %192, %193 : vector<1x256xi32>
    %195 = arith.andi %190, %194 : vector<1x256xi1>
    %196 = arith.extui %195 : vector<1x256xi1> to vector<1x256xi32>
    %197 = arith.sitofp %196 : vector<1x256xi32> to vector<1x256xf32>
    %cst = arith.constant 0.000000e+00 : f32
    %198 = vector.broadcast %cst : f32 to vector<12x256xf32>
    %c36 = arith.constant 36 : index
    %c0_75 = arith.constant 0 : index
    %199 = vector.load %arg6[%c36, %c0_75] : memref<48x256xf32, #tpu.memory_space<vmem>>, vector<12x256xf32>
    tpu.vector_store %arg6[%c36, %c0_75], %198 {strides = array<i32>} : memref<48x256xf32, #tpu.memory_space<vmem>>, vector<12x256xf32>,
    %c36_76 = arith.constant 36 : index
    %c0_77 = arith.constant 0 : index
    %200 = vector.load %arg7[%c36_76, %c0_77] : memref<48x256xf32, #tpu.memory_space<vmem>>, vector<12x256xf32>
    tpu.vector_store %arg7[%c36_76, %c0_77], %198 {strides = array<i32>} : memref<48x256xf32, #tpu.memory_space<vmem>>, vector<12x256xf32>,
    %c17_i32 = arith.constant 17 : i32
    %201 = tpu.dynamic_rotate %1 by %c17_i32 dim 1 : vector<4x256xf32>, i32 -> vector<4x256xf32>
    %c17_i32_78 = arith.constant 17 : i32
    %202 = tpu.dynamic_rotate %8 by %c17_i32_78 dim 1 : vector<4x256xf32>, i32 -> vector<4x256xf32>
    %203 = vector.broadcast %29 : vector<1x256xf32> to vector<4x256xf32>
    %204 = arith.mulf %201, %203 : vector<4x256xf32>
    %c0_79 = arith.constant 0 : index
    %c0_80 = arith.constant 0 : index
    %205 = vector.load %arg6[%c0_79, %c0_80] : memref<48x256xf32, #tpu.memory_space<vmem>>, vector<4x256xf32>
    tpu.vector_store %arg6[%c0_79, %c0_80], %204 {strides = array<i32>} : memref<48x256xf32, #tpu.memory_space<vmem>>, vector<4x256xf32>,
    %206 = vector.broadcast %29 : vector<1x256xf32> to vector<4x256xf32>
    %207 = arith.mulf %202, %206 : vector<4x256xf32>
    %cst_81 = arith.constant 1.000000e-07 : f32
    %208 = vector.broadcast %cst_81 : f32 to vector<4x256xf32>
    %209 = arith.addf %207, %208 : vector<4x256xf32>
    %c0_82 = arith.constant 0 : index
    %c0_83 = arith.constant 0 : index
    %210 = vector.load %arg7[%c0_82, %c0_83] : memref<48x256xf32, #tpu.memory_space<vmem>>, vector<4x256xf32>
    tpu.vector_store %arg7[%c0_82, %c0_83], %209 {strides = array<i32>} : memref<48x256xf32, #tpu.memory_space<vmem>>, vector<4x256xf32>,
    %c16_i32 = arith.constant 16 : i32
    %211 = tpu.dynamic_rotate %1 by %c16_i32 dim 1 : vector<4x256xf32>, i32 -> vector<4x256xf32>
    %c16_i32_84 = arith.constant 16 : i32
    %212 = tpu.dynamic_rotate %8 by %c16_i32_84 dim 1 : vector<4x256xf32>, i32 -> vector<4x256xf32>
    %213 = vector.broadcast %50 : vector<1x256xf32> to vector<4x256xf32>
    %214 = arith.mulf %211, %213 : vector<4x256xf32>
    %c4 = arith.constant 4 : index
    %c0_85 = arith.constant 0 : index
    %215 = vector.load %arg6[%c4, %c0_85] : memref<48x256xf32, #tpu.memory_space<vmem>>, vector<4x256xf32>
    tpu.vector_store %arg6[%c4, %c0_85], %214 {strides = array<i32>} : memref<48x256xf32, #tpu.memory_space<vmem>>, vector<4x256xf32>,
    %216 = vector.broadcast %50 : vector<1x256xf32> to vector<4x256xf32>
    %217 = arith.mulf %212, %216 : vector<4x256xf32>
    %cst_86 = arith.constant 1.000000e-07 : f32
    %218 = vector.broadcast %cst_86 : f32 to vector<4x256xf32>
    %219 = arith.addf %217, %218 : vector<4x256xf32>
    %c4_87 = arith.constant 4 : index
    %c0_88 = arith.constant 0 : index
    %220 = vector.load %arg7[%c4_87, %c0_88] : memref<48x256xf32, #tpu.memory_space<vmem>>, vector<4x256xf32>
    tpu.vector_store %arg7[%c4_87, %c0_88], %219 {strides = array<i32>} : memref<48x256xf32, #tpu.memory_space<vmem>>, vector<4x256xf32>,
    %c15_i32_89 = arith.constant 15 : i32
    %221 = tpu.dynamic_rotate %1 by %c15_i32_89 dim 1 : vector<4x256xf32>, i32 -> vector<4x256xf32>
    %c15_i32_90 = arith.constant 15 : i32
    %222 = tpu.dynamic_rotate %8 by %c15_i32_90 dim 1 : vector<4x256xf32>, i32 -> vector<4x256xf32>
    %223 = vector.broadcast %71 : vector<1x256xf32> to vector<4x256xf32>
    %224 = arith.mulf %221, %223 : vector<4x256xf32>
    %c8 = arith.constant 8 : index
    %c0_91 = arith.constant 0 : index
    %225 = vector.load %arg6[%c8, %c0_91] : memref<48x256xf32, #tpu.memory_space<vmem>>, vector<4x256xf32>
    tpu.vector_store %arg6[%c8, %c0_91], %224 {strides = array<i32>} : memref<48x256xf32, #tpu.memory_space<vmem>>, vector<4x256xf32>,
    %226 = vector.broadcast %71 : vector<1x256xf32> to vector<4x256xf32>
    %227 = arith.mulf %222, %226 : vector<4x256xf32>
    %cst_92 = arith.constant 1.000000e-07 : f32
    %228 = vector.broadcast %cst_92 : f32 to vector<4x256xf32>
    %229 = arith.addf %227, %228 : vector<4x256xf32>
    %c8_93 = arith.constant 8 : index
    %c0_94 = arith.constant 0 : index
    %230 = vector.load %arg7[%c8_93, %c0_94] : memref<48x256xf32, #tpu.memory_space<vmem>>, vector<4x256xf32>
    tpu.vector_store %arg7[%c8_93, %c0_94], %229 {strides = array<i32>} : memref<48x256xf32, #tpu.memory_space<vmem>>, vector<4x256xf32>,
    %c1_i32_95 = arith.constant 1 : i32
    %231 = tpu.dynamic_rotate %1 by %c1_i32_95 dim 1 : vector<4x256xf32>, i32 -> vector<4x256xf32>
    %c1_i32_96 = arith.constant 1 : i32
    %232 = tpu.dynamic_rotate %8 by %c1_i32_96 dim 1 : vector<4x256xf32>, i32 -> vector<4x256xf32>
    %233 = vector.broadcast %92 : vector<1x256xf32> to vector<4x256xf32>
    %234 = arith.mulf %231, %233 : vector<4x256xf32>
    %c12 = arith.constant 12 : index
    %c0_97 = arith.constant 0 : index
    %235 = vector.load %arg6[%c12, %c0_97] : memref<48x256xf32, #tpu.memory_space<vmem>>, vector<4x256xf32>
    tpu.vector_store %arg6[%c12, %c0_97], %234 {strides = array<i32>} : memref<48x256xf32, #tpu.memory_space<vmem>>, vector<4x256xf32>,
    %236 = vector.broadcast %92 : vector<1x256xf32> to vector<4x256xf32>
    %237 = arith.mulf %232, %236 : vector<4x256xf32>
    %cst_98 = arith.constant 1.000000e-07 : f32
    %238 = vector.broadcast %cst_98 : f32 to vector<4x256xf32>
    %239 = arith.addf %237, %238 : vector<4x256xf32>
    %c12_99 = arith.constant 12 : index
    %c0_100 = arith.constant 0 : index
    %240 = vector.load %arg7[%c12_99, %c0_100] : memref<48x256xf32, #tpu.memory_space<vmem>>, vector<4x256xf32>
    tpu.vector_store %arg7[%c12_99, %c0_100], %239 {strides = array<i32>} : memref<48x256xf32, #tpu.memory_space<vmem>>, vector<4x256xf32>,
    %241 = vector.broadcast %113 : vector<1x256xf32> to vector<4x256xf32>
    %242 = arith.mulf %1, %241 : vector<4x256xf32>
    %c16 = arith.constant 16 : index
    %c0_101 = arith.constant 0 : index
    %243 = vector.load %arg6[%c16, %c0_101] : memref<48x256xf32, #tpu.memory_space<vmem>>, vector<4x256xf32>
    tpu.vector_store %arg6[%c16, %c0_101], %242 {strides = array<i32>} : memref<48x256xf32, #tpu.memory_space<vmem>>, vector<4x256xf32>,
    %244 = vector.broadcast %113 : vector<1x256xf32> to vector<4x256xf32>
    %245 = arith.mulf %8, %244 : vector<4x256xf32>
    %cst_102 = arith.constant 1.000000e-07 : f32
    %246 = vector.broadcast %cst_102 : f32 to vector<4x256xf32>
    %247 = arith.addf %245, %246 : vector<4x256xf32>
    %c16_103 = arith.constant 16 : index
    %c0_104 = arith.constant 0 : index
    %248 = vector.load %arg7[%c16_103, %c0_104] : memref<48x256xf32, #tpu.memory_space<vmem>>, vector<4x256xf32>
    tpu.vector_store %arg7[%c16_103, %c0_104], %247 {strides = array<i32>} : memref<48x256xf32, #tpu.memory_space<vmem>>, vector<4x256xf32>,
    %c255_i32 = arith.constant 255 : i32
    %249 = tpu.dynamic_rotate %1 by %c255_i32 dim 1 : vector<4x256xf32>, i32 -> vector<4x256xf32>
    %c255_i32_105 = arith.constant 255 : i32
    %250 = tpu.dynamic_rotate %8 by %c255_i32_105 dim 1 : vector<4x256xf32>, i32 -> vector<4x256xf32>
    %251 = vector.broadcast %134 : vector<1x256xf32> to vector<4x256xf32>
    %252 = arith.mulf %249, %251 : vector<4x256xf32>
    %c20 = arith.constant 20 : index
    %c0_106 = arith.constant 0 : index
    %253 = vector.load %arg6[%c20, %c0_106] : memref<48x256xf32, #tpu.memory_space<vmem>>, vector<4x256xf32>
    tpu.vector_store %arg6[%c20, %c0_106], %252 {strides = array<i32>} : memref<48x256xf32, #tpu.memory_space<vmem>>, vector<4x256xf32>,
    %254 = vector.broadcast %134 : vector<1x256xf32> to vector<4x256xf32>
    %255 = arith.mulf %250, %254 : vector<4x256xf32>
    %cst_107 = arith.constant 1.000000e-07 : f32
    %256 = vector.broadcast %cst_107 : f32 to vector<4x256xf32>
    %257 = arith.addf %255, %256 : vector<4x256xf32>
    %c20_108 = arith.constant 20 : index
    %c0_109 = arith.constant 0 : index
    %258 = vector.load %arg7[%c20_108, %c0_109] : memref<48x256xf32, #tpu.memory_space<vmem>>, vector<4x256xf32>
    tpu.vector_store %arg7[%c20_108, %c0_109], %257 {strides = array<i32>} : memref<48x256xf32, #tpu.memory_space<vmem>>, vector<4x256xf32>,
    %c241_i32 = arith.constant 241 : i32
    %259 = tpu.dynamic_rotate %1 by %c241_i32 dim 1 : vector<4x256xf32>, i32 -> vector<4x256xf32>
    %c241_i32_110 = arith.constant 241 : i32
    %260 = tpu.dynamic_rotate %8 by %c241_i32_110 dim 1 : vector<4x256xf32>, i32 -> vector<4x256xf32>
    %261 = vector.broadcast %155 : vector<1x256xf32> to vector<4x256xf32>
    %262 = arith.mulf %259, %261 : vector<4x256xf32>
    %c24 = arith.constant 24 : index
    %c0_111 = arith.constant 0 : index
    %263 = vector.load %arg6[%c24, %c0_111] : memref<48x256xf32, #tpu.memory_space<vmem>>, vector<4x256xf32>
    tpu.vector_store %arg6[%c24, %c0_111], %262 {strides = array<i32>} : memref<48x256xf32, #tpu.memory_space<vmem>>, vector<4x256xf32>,
    %264 = vector.broadcast %155 : vector<1x256xf32> to vector<4x256xf32>
    %265 = arith.mulf %260, %264 : vector<4x256xf32>
    %cst_112 = arith.constant 1.000000e-07 : f32
    %266 = vector.broadcast %cst_112 : f32 to vector<4x256xf32>
    %267 = arith.addf %265, %266 : vector<4x256xf32>
    %c24_113 = arith.constant 24 : index
    %c0_114 = arith.constant 0 : index
    %268 = vector.load %arg7[%c24_113, %c0_114] : memref<48x256xf32, #tpu.memory_space<vmem>>, vector<4x256xf32>
    tpu.vector_store %arg7[%c24_113, %c0_114], %267 {strides = array<i32>} : memref<48x256xf32, #tpu.memory_space<vmem>>, vector<4x256xf32>,
    %c240_i32 = arith.constant 240 : i32
    %269 = tpu.dynamic_rotate %1 by %c240_i32 dim 1 : vector<4x256xf32>, i32 -> vector<4x256xf32>
    %c240_i32_115 = arith.constant 240 : i32
    %270 = tpu.dynamic_rotate %8 by %c240_i32_115 dim 1 : vector<4x256xf32>, i32 -> vector<4x256xf32>
    %271 = vector.broadcast %176 : vector<1x256xf32> to vector<4x256xf32>
    %272 = arith.mulf %269, %271 : vector<4x256xf32>
    %c28 = arith.constant 28 : index
    %c0_116 = arith.constant 0 : index
    %273 = vector.load %arg6[%c28, %c0_116] : memref<48x256xf32, #tpu.memory_space<vmem>>, vector<4x256xf32>
    tpu.vector_store %arg6[%c28, %c0_116], %272 {strides = array<i32>} : memref<48x256xf32, #tpu.memory_space<vmem>>, vector<4x256xf32>,
    %274 = vector.broadcast %176 : vector<1x256xf32> to vector<4x256xf32>
    %275 = arith.mulf %270, %274 : vector<4x256xf32>
    %cst_117 = arith.constant 1.000000e-07 : f32
    %276 = vector.broadcast %cst_117 : f32 to vector<4x256xf32>
    %277 = arith.addf %275, %276 : vector<4x256xf32>
    %c28_118 = arith.constant 28 : index
    %c0_119 = arith.constant 0 : index
    %278 = vector.load %arg7[%c28_118, %c0_119] : memref<48x256xf32, #tpu.memory_space<vmem>>, vector<4x256xf32>
    tpu.vector_store %arg7[%c28_118, %c0_119], %277 {strides = array<i32>} : memref<48x256xf32, #tpu.memory_space<vmem>>, vector<4x256xf32>,
    %c239_i32 = arith.constant 239 : i32
    %279 = tpu.dynamic_rotate %1 by %c239_i32 dim 1 : vector<4x256xf32>, i32 -> vector<4x256xf32>
    %c239_i32_120 = arith.constant 239 : i32
    %280 = tpu.dynamic_rotate %8 by %c239_i32_120 dim 1 : vector<4x256xf32>, i32 -> vector<4x256xf32>
    %281 = vector.broadcast %197 : vector<1x256xf32> to vector<4x256xf32>
    %282 = arith.mulf %279, %281 : vector<4x256xf32>
    %c32 = arith.constant 32 : index
    %c0_121 = arith.constant 0 : index
    %283 = vector.load %arg6[%c32, %c0_121] : memref<48x256xf32, #tpu.memory_space<vmem>>, vector<4x256xf32>
    tpu.vector_store %arg6[%c32, %c0_121], %282 {strides = array<i32>} : memref<48x256xf32, #tpu.memory_space<vmem>>, vector<4x256xf32>,
    %284 = vector.broadcast %197 : vector<1x256xf32> to vector<4x256xf32>
    %285 = arith.mulf %280, %284 : vector<4x256xf32>
    %cst_122 = arith.constant 1.000000e-07 : f32
    %286 = vector.broadcast %cst_122 : f32 to vector<4x256xf32>
    %287 = arith.addf %285, %286 : vector<4x256xf32>
    %c32_123 = arith.constant 32 : index
    %c0_124 = arith.constant 0 : index
    %288 = vector.load %arg7[%c32_123, %c0_124] : memref<48x256xf32, #tpu.memory_space<vmem>>, vector<4x256xf32>
    tpu.vector_store %arg7[%c32_123, %c0_124], %287 {strides = array<i32>} : memref<48x256xf32, #tpu.memory_space<vmem>>, vector<4x256xf32>,
    %c0_125 = arith.constant 0 : index
    %c0_126 = arith.constant 0 : index
    %289 = vector.load %arg6[%c0_125, %c0_126] : memref<48x256xf32, #tpu.memory_space<vmem>>, vector<48x256xf32>
    %c1_i32_127 = arith.constant 1 : i32
    %290 = tpu.dynamic_rotate %289 by %c1_i32_127 dim 1 : vector<48x256xf32>, i32 -> vector<48x256xf32>
    %291 = vector.broadcast %92 : vector<1x256xf32> to vector<48x256xf32>
    %292 = arith.mulf %290, %291 : vector<48x256xf32>
    %293 = arith.addf %289, %292 : vector<48x256xf32>
    %c255_i32_128 = arith.constant 255 : i32
    %294 = tpu.dynamic_rotate %289 by %c255_i32_128 dim 1 : vector<48x256xf32>, i32 -> vector<48x256xf32>
    %295 = vector.broadcast %134 : vector<1x256xf32> to vector<48x256xf32>
    %296 = arith.mulf %294, %295 : vector<48x256xf32>
    %297 = arith.addf %293, %296 : vector<48x256xf32>
    %c16_i32_129 = arith.constant 16 : i32
    %298 = tpu.dynamic_rotate %297 by %c16_i32_129 dim 1 : vector<48x256xf32>, i32 -> vector<48x256xf32>
    %299 = vector.broadcast %50 : vector<1x256xf32> to vector<48x256xf32>
    %300 = arith.mulf %298, %299 : vector<48x256xf32>
    %301 = arith.addf %297, %300 : vector<48x256xf32>
    %c240_i32_130 = arith.constant 240 : i32
    %302 = tpu.dynamic_rotate %297 by %c240_i32_130 dim 1 : vector<48x256xf32>, i32 -> vector<48x256xf32>
    %303 = vector.broadcast %176 : vector<1x256xf32> to vector<48x256xf32>
    %304 = arith.mulf %302, %303 : vector<48x256xf32>
    %305 = arith.addf %301, %304 : vector<48x256xf32>
    %c0_131 = arith.constant 0 : index
    %c0_132 = arith.constant 0 : index
    %306 = vector.load %arg7[%c0_131, %c0_132] : memref<48x256xf32, #tpu.memory_space<vmem>>, vector<48x256xf32>
    %307 = arith.mulf %306, %306 : vector<48x256xf32>
    %cst_133 = arith.constant dense<0.000000e+00> : vector<256xf32>
    %308 = vector.multi_reduction <add>, %307, %cst_133 [0] : vector<48x256xf32> to vector<256xf32>
    %309 = vector.shape_cast %308 : vector<256xf32> to vector<1x256xf32>
    %310 = math.rsqrt %309 : vector<1x256xf32>
    %311 = vector.broadcast %310 : vector<1x256xf32> to vector<48x256xf32>
    %312 = arith.mulf %306, %311 : vector<48x256xf32>
    %313 = tpu.transpose %312, [1, 0] : vector<48x256xf32> -> vector<256x48xf32>
    %314 = arith.truncf %313 : vector<256x48xf32> to vector<256x48xbf16>
    %315 = arith.truncf %305 : vector<48x256xf32> to vector<48x256xbf16>
    %cst_134 = arith.constant dense<0.000000e+00> : vector<256x256xf32>
    %316 = tpu.matmul %314, %315, %cst_134 {dimension_numbers = #tpu.dot_dimension_numbers<[1], [0], [0], [1], [0, 0, 1, 1], [], []>} : vector<256x48xbf16>, vector<48x256xbf16>, vector<256x256xf32> -> vector<256x256xf32>
    %cst_135 = arith.constant dense<0xFF800000> : vector<256xf32>
    %317 = vector.multi_reduction <maximumf>, %316, %cst_135 [0] : vector<256x256xf32> to vector<256xf32>
    %318 = vector.shape_cast %317 : vector<256xf32> to vector<1x256xf32>
    %319 = vector.broadcast %318 : vector<1x256xf32> to vector<256x256xf32>
    %320 = arith.subf %316, %319 : vector<256x256xf32>
    %321 = math.exp %320 : vector<256x256xf32>
    %cst_136 = arith.constant dense<0.000000e+00> : vector<256xf32>
    %322 = vector.multi_reduction <add>, %321, %cst_136 [0] : vector<256x256xf32> to vector<256xf32>
    %323 = vector.shape_cast %322 : vector<256xf32> to vector<1x256xf32>
    %324 = tpu.reciprocal %323 {approx = true} : vector<1x256xf32> -> vector<1x256xf32>
    %cst_137 = arith.constant 0.111111112 : f32
    %325 = vector.broadcast %cst_137 : f32 to vector<1x256xf32>
    %326 = arith.mulf %324, %325 : vector<1x256xf32>
    %327 = arith.truncf %312 : vector<48x256xf32> to vector<48x256xbf16>
    %328 = arith.truncf %321 : vector<256x256xf32> to vector<256x256xbf16>
    %cst_138 = arith.constant dense<0.000000e+00> : vector<48x256xf32>
    %329 = tpu.matmul %327, %328, %cst_138 {dimension_numbers = #tpu.dot_dimension_numbers<[1], [0], [0], [1], [0, 0, 1, 1], [], []>} : vector<48x256xbf16>, vector<256x256xbf16>, vector<48x256xf32> -> vector<48x256xf32>
    %330 = vector.broadcast %326 : vector<1x256xf32> to vector<48x256xf32>
    %331 = arith.mulf %329, %330 : vector<48x256xf32>
    %cst_139 = arith.constant 0.000000e+00 : f32
    %332 = vector.broadcast %cst_139 : f32 to vector<4x256xf32>
    %333 = vector.extract_strided_slice %331 {offsets = [0, 0], sizes = [4, 256], strides = [1, 1]} : vector<48x256xf32> to vector<4x256xf32>
    %c239_i32_140 = arith.constant 239 : i32
    %334 = tpu.dynamic_rotate %333 by %c239_i32_140 dim 1 : vector<4x256xf32>, i32 -> vector<4x256xf32>
    %335 = vector.broadcast %197 : vector<1x256xf32> to vector<4x256xf32>
    %336 = arith.mulf %334, %335 : vector<4x256xf32>
    %337 = arith.addf %332, %336 : vector<4x256xf32>
    %338 = vector.extract_strided_slice %331 {offsets = [4, 0], sizes = [4, 256], strides = [1, 1]} : vector<48x256xf32> to vector<4x256xf32>
    %c240_i32_141 = arith.constant 240 : i32
    %339 = tpu.dynamic_rotate %338 by %c240_i32_141 dim 1 : vector<4x256xf32>, i32 -> vector<4x256xf32>
    %340 = vector.broadcast %176 : vector<1x256xf32> to vector<4x256xf32>
    %341 = arith.mulf %339, %340 : vector<4x256xf32>
    %342 = arith.addf %337, %341 : vector<4x256xf32>
    %343 = vector.extract_strided_slice %331 {offsets = [8, 0], sizes = [4, 256], strides = [1, 1]} : vector<48x256xf32> to vector<4x256xf32>
    %c241_i32_142 = arith.constant 241 : i32
    %344 = tpu.dynamic_rotate %343 by %c241_i32_142 dim 1 : vector<4x256xf32>, i32 -> vector<4x256xf32>
    %345 = vector.broadcast %155 : vector<1x256xf32> to vector<4x256xf32>
    %346 = arith.mulf %344, %345 : vector<4x256xf32>
    %347 = arith.addf %342, %346 : vector<4x256xf32>
    %348 = vector.extract_strided_slice %331 {offsets = [12, 0], sizes = [4, 256], strides = [1, 1]} : vector<48x256xf32> to vector<4x256xf32>
    %c255_i32_143 = arith.constant 255 : i32
    %349 = tpu.dynamic_rotate %348 by %c255_i32_143 dim 1 : vector<4x256xf32>, i32 -> vector<4x256xf32>
    %350 = vector.broadcast %134 : vector<1x256xf32> to vector<4x256xf32>
    %351 = arith.mulf %349, %350 : vector<4x256xf32>
    %352 = arith.addf %347, %351 : vector<4x256xf32>
    %353 = vector.extract_strided_slice %331 {offsets = [16, 0], sizes = [4, 256], strides = [1, 1]} : vector<48x256xf32> to vector<4x256xf32>
    %354 = arith.addf %352, %353 : vector<4x256xf32>
    %355 = vector.extract_strided_slice %331 {offsets = [20, 0], sizes = [4, 256], strides = [1, 1]} : vector<48x256xf32> to vector<4x256xf32>
    %c1_i32_144 = arith.constant 1 : i32
    %356 = tpu.dynamic_rotate %355 by %c1_i32_144 dim 1 : vector<4x256xf32>, i32 -> vector<4x256xf32>
    %357 = vector.broadcast %92 : vector<1x256xf32> to vector<4x256xf32>
    %358 = arith.mulf %356, %357 : vector<4x256xf32>
    %359 = arith.addf %354, %358 : vector<4x256xf32>
    %360 = vector.extract_strided_slice %331 {offsets = [24, 0], sizes = [4, 256], strides = [1, 1]} : vector<48x256xf32> to vector<4x256xf32>
    %c15_i32_145 = arith.constant 15 : i32
    %361 = tpu.dynamic_rotate %360 by %c15_i32_145 dim 1 : vector<4x256xf32>, i32 -> vector<4x256xf32>
    %362 = vector.broadcast %71 : vector<1x256xf32> to vector<4x256xf32>
    %363 = arith.mulf %361, %362 : vector<4x256xf32>
    %364 = arith.addf %359, %363 : vector<4x256xf32>
    %365 = vector.extract_strided_slice %331 {offsets = [28, 0], sizes = [4, 256], strides = [1, 1]} : vector<48x256xf32> to vector<4x256xf32>
    %c16_i32_146 = arith.constant 16 : i32
    %366 = tpu.dynamic_rotate %365 by %c16_i32_146 dim 1 : vector<4x256xf32>, i32 -> vector<4x256xf32>
    %367 = vector.broadcast %50 : vector<1x256xf32> to vector<4x256xf32>
    %368 = arith.mulf %366, %367 : vector<4x256xf32>
    %369 = arith.addf %364, %368 : vector<4x256xf32>
    %370 = vector.extract_strided_slice %331 {offsets = [32, 0], sizes = [4, 256], strides = [1, 1]} : vector<48x256xf32> to vector<4x256xf32>
    %c17_i32_147 = arith.constant 17 : i32
    %371 = tpu.dynamic_rotate %370 by %c17_i32_147 dim 1 : vector<4x256xf32>, i32 -> vector<4x256xf32>
    %372 = vector.broadcast %29 : vector<1x256xf32> to vector<4x256xf32>
    %373 = arith.mulf %371, %372 : vector<4x256xf32>
    %374 = arith.addf %369, %373 : vector<4x256xf32>
    %cst_148 = arith.constant 1.000000e+00 : f32
    %375 = vector.broadcast %cst_148 : f32 to vector<1x256xf32>
    %376 = arith.subf %375, %3 : vector<1x256xf32>
    %377 = vector.broadcast %376 : vector<1x256xf32> to vector<4x256xf32>
    %378 = arith.mulf %374, %377 : vector<4x256xf32>
    %379 = vector.broadcast %3 : vector<1x256xf32> to vector<4x256xf32>
    %380 = arith.mulf %1, %379 : vector<4x256xf32>
    %381 = arith.addf %378, %380 : vector<4x256xf32>
    %c0_149 = arith.constant 0 : index
    %c0_150 = arith.constant 0 : index
    %382 = vector.load %arg4[%c0_149, %c0_150] : memref<13x5xf32, #tpu.memory_space<vmem>>, vector<13x5xf32>
    %383 = vector.extract_strided_slice %382 {offsets = [0, 0], sizes = [4, 4], strides = [1, 1]} : vector<13x5xf32> to vector<4x4xf32>
    %384 = vector.extract_strided_slice %382 {offsets = [4, 0], sizes = [4, 4], strides = [1, 1]} : vector<13x5xf32> to vector<4x4xf32>
    %385 = vector.extract_strided_slice %382 {offsets = [4, 4], sizes = [4, 1], strides = [1, 1]} : vector<13x5xf32> to vector<4x1xf32>
    %386 = vector.extract_strided_slice %382 {offsets = [8, 0], sizes = [4, 4], strides = [1, 1]} : vector<13x5xf32> to vector<4x4xf32>
    %387 = vector.extract_strided_slice %382 {offsets = [8, 4], sizes = [4, 1], strides = [1, 1]} : vector<13x5xf32> to vector<4x1xf32>
    %388 = vector.extract_strided_slice %382 {offsets = [12, 0], sizes = [1, 4], strides = [1, 1]} : vector<13x5xf32> to vector<1x4xf32>
    %cst_151 = arith.constant dense<0.000000e+00> : vector<4xf32>
    %389 = vector.multi_reduction <add>, %381, %cst_151 [1] : vector<4x256xf32> to vector<4xf32>
    %390 = vector.shape_cast %389 : vector<4xf32> to vector<4x1xf32>
    %cst_152 = arith.constant 2.560000e+02 : f32
    %391 = vector.broadcast %cst_152 : f32 to vector<4x1xf32>
    %392 = arith.divf %390, %391 : vector<4x1xf32>
    %393 = vector.broadcast %392 : vector<4x1xf32> to vector<4x4xf32>
    %394 = arith.mulf %383, %393 : vector<4x4xf32>
    %cst_153 = arith.constant dense<0.000000e+00> : vector<4xf32>
    %395 = vector.multi_reduction <add>, %394, %cst_153 [0] : vector<4x4xf32> to vector<4xf32>
    %396 = vector.shape_cast %395 : vector<4xf32> to vector<1x4xf32>
    %397 = arith.addf %396, %388 : vector<1x4xf32>
    %cst_154 = arith.constant 0.000000e+00 : f32
    %398 = vector.broadcast %cst_154 : f32 to vector<1x4xf32>
    %399 = arith.maximumf %397, %398 : vector<1x4xf32>
    %400 = vector.broadcast %399 : vector<1x4xf32> to vector<4x4xf32>
    %401 = arith.mulf %384, %400 : vector<4x4xf32>
    %cst_155 = arith.constant dense<0.000000e+00> : vector<4xf32>
    %402 = vector.multi_reduction <add>, %401, %cst_155 [1] : vector<4x4xf32> to vector<4xf32>
    %403 = vector.shape_cast %402 : vector<4xf32> to vector<4x1xf32>
    %404 = arith.addf %403, %385 : vector<4x1xf32>
    %405 = arith.negf %404 : vector<4x1xf32>
    %406 = math.exp %405 : vector<4x1xf32>
    %cst_156 = arith.constant 1.000000e+00 : f32
    %407 = vector.broadcast %cst_156 : f32 to vector<4x1xf32>
    %408 = arith.addf %407, %406 : vector<4x1xf32>
    %409 = arith.divf %407, %408 : vector<4x1xf32>
    %410 = vector.broadcast %409 : vector<4x1xf32> to vector<4x256xf32>
    %411 = arith.mulf %381, %410 : vector<4x256xf32>
    %cst_157 = arith.constant 0.000000e+00 : f32
    %412 = vector.broadcast %cst_157 : f32 to vector<4x256xf32>
    %413 = vector.extract_strided_slice %386 {offsets = [0, 0], sizes = [4, 1], strides = [1, 1]} : vector<4x4xf32> to vector<4x1xf32>
    %414 = vector.extract_strided_slice %411 {offsets = [0, 0], sizes = [1, 256], strides = [1, 1]} : vector<4x256xf32> to vector<1x256xf32>
    %415 = vector.broadcast %413 : vector<4x1xf32> to vector<4x256xf32>
    %416 = vector.broadcast %414 : vector<1x256xf32> to vector<4x256xf32>
    %417 = arith.mulf %415, %416 : vector<4x256xf32>
    %418 = arith.addf %412, %417 : vector<4x256xf32>
    %419 = vector.extract_strided_slice %386 {offsets = [0, 1], sizes = [4, 1], strides = [1, 1]} : vector<4x4xf32> to vector<4x1xf32>
    %420 = vector.extract_strided_slice %411 {offsets = [1, 0], sizes = [1, 256], strides = [1, 1]} : vector<4x256xf32> to vector<1x256xf32>
    %421 = vector.broadcast %419 : vector<4x1xf32> to vector<4x256xf32>
    %422 = vector.broadcast %420 : vector<1x256xf32> to vector<4x256xf32>
    %423 = arith.mulf %421, %422 : vector<4x256xf32>
    %424 = arith.addf %418, %423 : vector<4x256xf32>
    %425 = vector.extract_strided_slice %386 {offsets = [0, 2], sizes = [4, 1], strides = [1, 1]} : vector<4x4xf32> to vector<4x1xf32>
    %426 = vector.extract_strided_slice %411 {offsets = [2, 0], sizes = [1, 256], strides = [1, 1]} : vector<4x256xf32> to vector<1x256xf32>
    %427 = vector.broadcast %425 : vector<4x1xf32> to vector<4x256xf32>
    %428 = vector.broadcast %426 : vector<1x256xf32> to vector<4x256xf32>
    %429 = arith.mulf %427, %428 : vector<4x256xf32>
    %430 = arith.addf %424, %429 : vector<4x256xf32>
    %431 = vector.extract_strided_slice %386 {offsets = [0, 3], sizes = [4, 1], strides = [1, 1]} : vector<4x4xf32> to vector<4x1xf32>
    %432 = vector.extract_strided_slice %411 {offsets = [3, 0], sizes = [1, 256], strides = [1, 1]} : vector<4x256xf32> to vector<1x256xf32>
    %433 = vector.broadcast %431 : vector<4x1xf32> to vector<4x256xf32>
    %434 = vector.broadcast %432 : vector<1x256xf32> to vector<4x256xf32>
    %435 = arith.mulf %433, %434 : vector<4x256xf32>
    %436 = arith.addf %430, %435 : vector<4x256xf32>
    %437 = vector.broadcast %387 : vector<4x1xf32> to vector<4x256xf32>
    %438 = arith.addf %436, %437 : vector<4x256xf32>
    %c0_158 = arith.constant 0 : index
    %c0_159 = arith.constant 0 : index
    %c0_160 = arith.constant 0 : index
    %439 = vector.load %arg5[%c0_158, %c0_159, %c0_160] : memref<1x4x256xf32, #tpu.memory_space<vmem>>, vector<1x4x256xf32>
    %440 = vector.shape_cast %439 : vector<1x4x256xf32> to vector<4x256xf32>
    %441 = vector.shape_cast %438 : vector<4x256xf32> to vector<1x4x256xf32>
    tpu.vector_store %arg5[%c0_158, %c0_159, %c0_160], %441 {strides = array<i32>} : memref<1x4x256xf32, #tpu.memory_space<vmem>>, vector<1x4x256xf32>,
    return
  }
  func.func @transform_0(%arg0: i32) -> (i32, i32, i32) {
    %c0_i32 = arith.constant 0 : i32
    %c0_i32_0 = arith.constant 0 : i32
    %c0_i32_1 = arith.constant 0 : i32
    return %arg0, %c0_i32, %c0_i32_0 : i32, i32, i32
  }
  func.func @transform_1(%arg0: i32) -> (i32, i32, i32) {
    %c0_i32 = arith.constant 0 : i32
    %c0_i32_0 = arith.constant 0 : i32
    %c0_i32_1 = arith.constant 0 : i32
    return %arg0, %c0_i32, %c0_i32_0 : i32, i32, i32
  }
  func.func @transform_2(%arg0: i32) -> (i32, i32) {
    %c0_i32 = arith.constant 0 : i32
    %c0_i32_0 = arith.constant 0 : i32
    %c0_i32_1 = arith.constant 0 : i32
    return %c0_i32, %c0_i32_0 : i32, i32
  }
  func.func @transform_3(%arg0: i32) -> (i32, i32) {
    %c0_i32 = arith.constant 0 : i32
    %c0_i32_0 = arith.constant 0 : i32
    %c0_i32_1 = arith.constant 0 : i32
    return %c0_i32, %c0_i32_0 : i32, i32
  }
  func.func @transform_4(%arg0: i32) -> (i32, i32, i32) {
    %c0_i32 = arith.constant 0 : i32
    %c0_i32_0 = arith.constant 0 : i32
    %c0_i32_1 = arith.constant 0 : i32
    return %arg0, %c0_i32, %c0_i32_0 : i32, i32, i32
  }
}

</mosaic_0001>

<llo_original>
// kernel: _lambda_.1
$region0: #{_lambda_.1}
  #allocation0 [shape = 'u32[]', space=smem, size = 0x4, offset = 0x4, fixed_abs, tag = 'smem constant byte address 0x4 - core index']
  #allocation1 [shape = 'u32[72,128]{1,0:T(1,128)}', space=vmem, size = 0x9000, scoped, tag = 'internal scratch']
  #allocation2 [shape = 'f32[48,256]{1,0:T(8,128)}', space=vmem, size = 0xc000, scoped, tag = 'scratch operand']
  #allocation3 [shape = 'f32[48,256]{1,0:T(8,128)}', space=vmem, size = 0xc000, scoped, tag = 'scratch operand']
  %s0 = inlined_call_operand.vmem [shape: f32[2,4,256], index: 0, kind: input, shape index: {}]
  %s1 = inlined_call_operand.vmem [shape: f32[2,1,256], index: 1, kind: input, shape index: {}]
  %s2 = inlined_call_operand.vmem [shape: s32[2,256], index: 2, kind: input, shape index: {}]
  %s3 = inlined_call_operand.vmem [shape: f32[13,5], index: 3, kind: input, shape index: {}]
  %s4 = inlined_call_operand.vmem [shape: f32[2,4,256], index: 4, kind: output, shape index: {}]
  %s5 = sld [smem:[#allocation0]]
  $region49: #{_lambda_.1} parent=0
    _
  %s7 = ssub.s32 1, %s5
  %s8 = scalar_select 0, %s7, %s5
  loop: start=0, step=1, limit=4
  $region2: #{_lambda_.1} parent=0 // loop_pre_header
    _
  $region3: #{_lambda_.1} parent=0 // loop_header
    %s10 = sphi 0, %s14
    %p11 = scmp.ge.s32.totalorder %s10, 4
    %s20 = sphi 0, %s22
    %s23 = sphi 0, %s20
    %s24 = sphi 0, %s23
    %s40 = sphi 0, %s24
    %s46 = sphi 0, %s48
    %s49 = sphi 0, %s46
    %s50 = sphi 0, %s49
    %s66 = sphi 0, %s50
    %s70 = sphi 0, %s70
    %s72 = sphi 0, %s70
    %s73 = sphi 0, %s72
    %s87 = sphi 0, %s73
    %s91 = sphi 0, %s91
    %s93 = sphi 0, %s91
    %s94 = sphi 0, %s93
    %s108 = sphi 0, %s94
    %s114 = sphi 0, %s116
    %s117 = sphi 0, %s114
    %s118 = sphi 0, %s117
    %s134 = sphi 0, %s118
  $region4: #{_lambda_.1} parent=0 // loop_header_branch
    %13 = sbr.rel (%p11) target = $region8
  $region5: #{_lambda_.1} parent=0 // loop_body
    %s15 = ssub.s32 %s10, 1
    %s16 = ssub.s32 %s10, 2
    %s17 = sadd.s32 %s10, 1
    %s18 = ssub.s32 %s10, %s17
    %p19 = scmp.eq.s32.totalorder %s18, 0
    %s21 = sadd.s32 %s20, 1
    %s22 = scalar_select %p19, %s20, %s21
    %p25 = pneg %p19
    %p26 = scmp.eq.s32.totalorder %s10, 1
    %p27 = por %p25, %p26
    %p28 = scmp.ne.s32.totalorder %s20, %s23
    %p29 = scmp.eq.s32.totalorder %s10, 0
    %p30 = por %p28, %p29
    %p31 = scmp.ne.s32.totalorder %s20, %s23
    %p32 = scmp.eq.s32.totalorder %s15, 1
    %p33 = por %p31, %p32
    %p34 = scmp.ne.s32.totalorder %s23, %s24
    %p35 = scmp.eq.s32.totalorder %s15, 0
    %p36 = por %p34, %p35
    %p37 = scmp.ne.s32.totalorder %s23, %s24
    %p38 = scmp.eq.s32.totalorder %s16, 1
    %p39 = por %p37, %p38
    %p41 = scmp.ne.s32.totalorder %s24, %s40
    %p42 = scmp.eq.s32.totalorder %s16, 0
    %p43 = por %p41, %p42
    %s44 = ssub.s32 %s10, %s17
    %p45 = scmp.eq.s32.totalorder %s44, 0
    %s47 = sadd.s32 %s46, 1
    %s48 = scalar_select %p45, %s46, %s47
    %p51 = pneg %p45
    %p52 = scmp.eq.s32.totalorder %s10, 1
    %p53 = por %p51, %p52
    %p54 = scmp.ne.s32.totalorder %s46, %s49
    %p55 = scmp.eq.s32.totalorder %s10, 0
    %p56 = por %p54, %p55
    %p57 = scmp.ne.s32.totalorder %s46, %s49
    %p58 = scmp.eq.s32.totalorder %s15, 1
    %p59 = por %p57, %p58
    %p60 = scmp.ne.s32.totalorder %s49, %s50
    %p61 = scmp.eq.s32.totalorder %s15, 0
    %p62 = por %p60, %p61
    %p63 = scmp.ne.s32.totalorder %s49, %s50
    %p64 = scmp.eq.s32.totalorder %s16, 1
    %p65 = por %p63, %p64
    %p67 = scmp.ne.s32.totalorder %s50, %s66
    %p68 = scmp.eq.s32.totalorder %s16, 0
    %p69 = por %p67, %p68
    %s71 = sadd.s32 %s70, 1
    %p74 = scmp.eq.s32.totalorder %s10, 1
    %p75 = scmp.ne.s32.totalorder %s70, %s72
    %p76 = scmp.eq.s32.totalorder %s10, 0
    %p77 = por %p75, %p76
    %p78 = scmp.ne.s32.totalorder %s70, %s72
    %p79 = scmp.eq.s32.totalorder %s15, 1
    %p80 = por %p78, %p79
    %p81 = scmp.ne.s32.totalorder %s72, %s73
    %p82 = scmp.eq.s32.totalorder %s15, 0
    %p83 = por %p81, %p82
    %p84 = scmp.ne.s32.totalorder %s72, %s73
    %p85 = scmp.eq.s32.totalorder %s16, 1
    %p86 = por %p84, %p85
    %p88 = scmp.ne.s32.totalorder %s73, %s87
    %p89 = scmp.eq.s32.totalorder %s16, 0
    %p90 = por %p88, %p89
    %s92 = sadd.s32 %s91, 1
    %p95 = scmp.eq.s32.totalorder %s10, 1
    %p96 = scmp.ne.s32.totalorder %s91, %s93
    %p97 = scmp.eq.s32.totalorder %s10, 0
    %p98 = por %p96, %p97
    %p99 = scmp.ne.s32.totalorder %s91, %s93
    %p100 = scmp.eq.s32.totalorder %s15, 1
    %p101 = por %p99, %p100
    %p102 = scmp.ne.s32.totalorder %s93, %s94
    %p103 = scmp.eq.s32.totalorder %s15, 0
    %p104 = por %p102, %p103
    %p105 = scmp.ne.s32.totalorder %s93, %s94
    %p106 = scmp.eq.s32.totalorder %s16, 1
    %p107 = por %p105, %p106
    %p109 = scmp.ne.s32.totalorder %s94, %s108
    %p110 = scmp.eq.s32.totalorder %s16, 0
    %p111 = por %p109, %p110
    %s112 = ssub.s32 %s10, %s17
    %p113 = scmp.eq.s32.totalorder %s112, 0
    %s115 = sadd.s32 %s114, 1
    %s116 = scalar_select %p113, %s114, %s115
    %p119 = pneg %p113
    %p120 = scmp.eq.s32.totalorder %s10, 1
    %p121 = por %p119, %p120
    %p122 = scmp.ne.s32.totalorder %s114, %s117
    %p123 = scmp.eq.s32.totalorder %s10, 0
    %p124 = por %p122, %p123
    %p125 = scmp.ne.s32.totalorder %s114, %s117
    %p126 = scmp.eq.s32.totalorder %s15, 1
    %p127 = por %p125, %p126
    %p128 = scmp.ne.s32.totalorder %s117, %s118
    %p129 = scmp.eq.s32.totalorder %s15, 0
    %p130 = por %p128, %p129
    %p131 = scmp.ne.s32.totalorder %s117, %s118
    %p132 = scmp.eq.s32.totalorder %s16, 1
    %p133 = por %p131, %p132
    %p135 = scmp.ne.s32.totalorder %s118, %s134
    %p136 = scmp.eq.s32.totalorder %s16, 0
    %p137 = por %p135, %p136
    %p138 = scmp.le.s32.totalorder 1, %s10
    %p139 = scmp.lt.s32.totalorder %s10, 3
    %p140 = pnand %p138, %p139
    %p141 = pneg %p140
    // Predicated region
    $region9: #{_lambda_.1} parent=5 // pred_check
      _
    $region10: #{_lambda_.1} parent=5 // pred_check_branch
      %143 = sbr.rel (%p140) target = $region12
    $region11: #{_lambda_.1} parent=5 // pred_region
      %s144 = ssub.s32 %s10, 1
      // Predicated region
      $region13: #{_lambda_.1} parent=11 // pred_check
        %p145 = pneg %p83
      $region14: #{_lambda_.1} parent=11 // pred_check_branch
        %147 = sbr.rel (%p145) target = $region16
      $region15: #{_lambda_.1} parent=11 // pred_region
        _
      $region16: #{_lambda_.1} parent=11 // pred_fallthru
        _
      // Predicated region
      $region17: #{_lambda_.1} parent=11 // pred_check
        %p148 = pneg %p104
      $region18: #{_lambda_.1} parent=11 // pred_check_branch
        %150 = sbr.rel (%p148) target = $region20
      $region19: #{_lambda_.1} parent=11 // pred_region
        _
      $region20: #{_lambda_.1} parent=11 // pred_fallthru
        _
    $region12: #{_lambda_.1} parent=5 // pred_fallthru
      _
    %p151 = scmp.lt.s32.totalorder %s10, 2
    // Predicated region
    $region21: #{_lambda_.1} parent=5 // pred_check
      %p152 = pneg %p151
    $region22: #{_lambda_.1} parent=5 // pred_check_branch
      %154 = sbr.rel (%p152) target = $region24
    $region23: #{_lambda_.1} parent=5 // pred_region
      // Predicated region
      $region25: #{_lambda_.1} parent=23 // pred_check
        %p155 = pneg %p30
      $region26: #{_lambda_.1} parent=23 // pred_check_branch
        %157 = sbr.rel (%p155) target = $region28
      $region27: #{_lambda_.1} parent=23 // pred_region
        %p158 = scmp.lt.s32.totalorder %s10, 1
        %s159 = scalar_select %p158, %s10, 1
        %s160 = smul.addr %s159, 2
        %s161 = smul.addr %s160, 4
        %s162 = scalar_lea.vmem %s0, %s161
      $region28: #{_lambda_.1} parent=23 // pred_fallthru
        _
      // Predicated region
      $region29: #{_lambda_.1} parent=23 // pred_check
        %p163 = pneg %p56
      $region30: #{_lambda_.1} parent=23 // pred_check_branch
        %165 = sbr.rel (%p163) target = $region32
      $region31: #{_lambda_.1} parent=23 // pred_region
        %p166 = scmp.lt.s32.totalorder %s10, 1
        %s167 = scalar_select %p166, %s10, 1
        %s168 = smul.addr %s167, 2
        %s169 = scalar_lea.vmem %s1, %s168
      $region32: #{_lambda_.1} parent=23 // pred_fallthru
        _
    $region24: #{_lambda_.1} parent=5 // pred_fallthru
      _
    %p170 = scmp.le.s32.totalorder 1, %s10
    %p171 = scmp.lt.s32.totalorder %s10, 3
    %p172 = pnand %p170, %p171
    %p173 = pneg %p172
    // Predicated region
    $region33: #{_lambda_.1} parent=5 // pred_check
      _
    $region34: #{_lambda_.1} parent=5 // pred_check_branch
      %175 = sbr.rel (%p172) target = $region36
    $region35: #{_lambda_.1} parent=5 // pred_region
      %s176 = ssub.s32 %s10, 1
      %p177 = scmp.lt.s32.totalorder %s15, 1
      %s178 = scalar_select %p177, %s15, 1
      %s179 = smul.addr %s178, 2
      %s180 = smul.addr %s179, 4
      %s181 = scalar_lea.vmem %s0, %s180
      %p182 = pneg %p36
      %p183 = pneg %p33
      %p184 = scmp.lt.s32.totalorder %s15, 1
      %s185 = scalar_select %p184, %s15, 1
      %s186 = smul.addr %s185, 2
      %s187 = scalar_lea.vmem %s1, %s186
      %p188 = pneg %p62
      %p189 = pneg %p59
      %p190 = pneg %p83
      %p191 = pneg %p80
      %p192 = pneg %p104
      %p193 = pneg %p101
      %p194 = pneg %p130
      %p195 = pneg %p127
      %p196 = scmp.lt.s32.totalorder %s15, 1
      %s197 = scalar_select %p196, %s15, 1
      %s198 = smul.addr %s197, 2
      %s199 = smul.addr %s198, 4
      %s200 = scalar_lea.vmem %s4, %s199
      %p201 = scmp.lt.s32.totalorder %s15, 1
      %s202 = scalar_select %p201, %s15, 1
      %s203 = smul.addr %s202, 2
      %s204 = smul.addr %s203, 4
      %s205 = scalar_lea.vmem %s0, %s204
      %p206 = scmp.lt.s32.totalorder %s15, 1
      %s207 = scalar_select %p206, %s15, 1
      %s208 = smul.addr %s207, 2
      %s209 = scalar_lea.vmem %s1, %s208
      %p210 = scmp.lt.s32.totalorder %s15, 1
      %s211 = scalar_select %p210, %s15, 1
      %s212 = smul.addr %s211, 2
      %s213 = smul.addr %s212, 4
      %s214 = scalar_lea.vmem %s4, %s213
      %v216 = vld [vmem:[%s205] sm:$0xff]
      %v217 = vld [vmem:[%s209] sm:$0x3]
      %v218 = vld [vmem:[%s2] sm:$0xf]
      %v220 = vperm.slane %v217, 0
      %v221 = vperm.slane %v217, 1
      %v222 = vrot.slane %v221, 4
      %vm223 = vcmask 1043456
      %v224 = vsel %vm223, %v220, %v222
      %v226 = vmul.f32 %v216, %v224
      %v227 = vadd.s32 %v218, 4294967295
      %vm228 = vcmp.ge.s32.totalorder %v227, 0
      %vm229 = vcmp.le.s32.totalorder %v227, 15
      %vm230 = vmand %vm228, %vm229
      %v231 = vsel %vm228, 1, 0
      %v232 = vrot.slane %v231, 7
      %v233 = vrot.slane %v232, 2
      %vm234 = vcmp.ne.s32.totalorder %v233, 0
      %vm235 = vmand %vm230, %vm234
      %v236 = vsel %vm229, 1, 0
      %v237 = vrot.slane %v236, 7
      %v238 = vrot.slane %v237, 2
      %vm239 = vcmp.ne.s32.totalorder %v238, 0
      %vm240 = vmand %vm235, %vm239
      %v241 = vsel %vm240, 1, 0
      %v242 = vcvt.s32.f32 %v241
      %vm243 = vcmp.ge.s32.totalorder %v218, 0
      %v244 = vsel %vm243, 1, 0
      %v245 = vrot.slane %v244, 7
      %v246 = vrot.slane %v245, 2
      %vm247 = vcmp.ne.s32.totalorder %v246, 0
      %vm248 = vmand %vm230, %vm247
      %vm249 = vcmp.le.s32.totalorder %v218, 15
      %v250 = vsel %vm249, 1, 0
      %v251 = vrot.slane %v250, 7
      %v252 = vrot.slane %v251, 2
      %vm253 = vcmp.ne.s32.totalorder %v252, 0
      %vm254 = vmand %vm248, %vm253
      %v255 = vsel %vm254, 1, 0
      %v256 = vcvt.s32.f32 %v255
      %v257 = vadd.s32 %v218, 1
      %vm258 = vcmp.ge.s32.totalorder %v257, 0
      %v259 = vsel %vm258, 1, 0
      %v260 = vrot.slane %v259, 7
      %v261 = vrot.slane %v260, 2
      %vm262 = vcmp.ne.s32.totalorder %v261, 0
      %vm263 = vmand %vm230, %vm262
      %vm264 = vcmp.le.s32.totalorder %v257, 15
      %v265 = vsel %vm264, 1, 0
      %v266 = vrot.slane %v265, 7
      %v267 = vrot.slane %v266, 2
      %vm268 = vcmp.ne.s32.totalorder %v267, 0
      %vm269 = vmand %vm263, %vm268
      %v270 = vsel %vm269, 1, 0
      %v271 = vcvt.s32.f32 %v270
      %vm272 = vmand %vm243, %vm249
      %vm273 = vmand %vm272, %vm234
      %vm274 = vmand %vm273, %vm239
      %v275 = vsel %vm274, 1, 0
      %v276 = vcvt.s32.f32 %v275
      %vm277 = vmand %vm272, %vm247
      %vm278 = vmand %vm277, %vm253
      %v279 = vsel %vm278, 1, 0
      %v280 = vcvt.s32.f32 %v279
      %vm281 = vmand %vm272, %vm262
      %vm282 = vmand %vm281, %vm268
      %v283 = vsel %vm282, 1, 0
      %v284 = vcvt.s32.f32 %v283
      %vm285 = vmand %vm258, %vm264
      %vm286 = vmand %vm285, %vm234
      %vm287 = vmand %vm286, %vm239
      %v288 = vsel %vm287, 1, 0
      %v289 = vcvt.s32.f32 %v288
      %vm290 = vmand %vm285, %vm247
      %vm291 = vmand %vm290, %vm253
      %v292 = vsel %vm291, 1, 0
      %v293 = vcvt.s32.f32 %v292
      %vm294 = vmand %vm285, %vm262
      %vm295 = vmand %vm294, %vm268
      %v296 = vsel %vm295, 1, 0
      %v297 = vcvt.s32.f32 %v296
      %298 = vst [vmem:[#allocation2 + $0x40] sm:$0xf0] 0.0
      %299 = vst [vmem:[#allocation2 + $0x48] sm:$0xf0] 0.0
      %300 = vst [vmem:[#allocation2 + $0x50] sm:$0xff] 0.0
      %301 = vst [vmem:[#allocation2 + $0x58] sm:$0xff] 0.0
      %302 = vst [vmem:[#allocation3 + $0x40] sm:$0xf0] 0.0
      %303 = vst [vmem:[#allocation3 + $0x48] sm:$0xf0] 0.0
      %304 = vst [vmem:[#allocation3 + $0x50] sm:$0xff] 0.0
      %305 = vst [vmem:[#allocation3 + $0x58] sm:$0xff] 0.0
      %307 = vst [vmem:[#allocation1] ss:$2 sm:$0xff] %v216
      %v308 = vld.sshfl [vmem:[#allocation1] sm:$0xff pattern:$0x75316420]
      %v309 = vld.sshfl [vmem:[#allocation1 + $0x8] sm:$0xff pattern:$0x75316420]
      %312 = vrot.lane.b32.xlu0 %v308, 17
      %v313 = vpop.permute.xlu0 %312
      %314 = vrot.lane.b32.xlu0 %v309, 17
      %v315 = vpop.permute.xlu0 %314
      %v316 = vlaneseq
      %v317 = vand.u32 %v316, 127
      %vm318 = vcmp.lt.s32.totalorder %v317, 17
      %v319 = vsel %vm318, %v313, %v315
      %v320 = vsel %vm318, %v315, %v313
      %322 = vst [vmem:[#allocation1] ss:$2 sm:$0xff] %v226
      %v323 = vld.sshfl [vmem:[#allocation1] sm:$0xff pattern:$0x75316420]
      %v324 = vld.sshfl [vmem:[#allocation1 + $0x8] sm:$0xff pattern:$0x75316420]
      %327 = vrot.lane.b32.xlu0 %v323, 17
      %v328 = vpop.permute.xlu0 %327
      %329 = vrot.lane.b32.xlu0 %v324, 17
      %v330 = vpop.permute.xlu0 %329
      %v331 = vsel %vm318, %v328, %v330
      %v332 = vsel %vm318, %v330, %v328
      %v334 = vperm.slane %v242, 0
      %v335 = vperm.slane %v242, 2
      %v338 = vperm.slane %v334, 0
      %v339 = vperm.slane %v335, 0
      %v340 = vmul.f32 %v320, %v338
      %v341 = vmul.f32 %v319, %v339
      %342 = vst [vmem:[#allocation2] sm:$0xf] %v340
      %343 = vst [vmem:[#allocation2 + $0x8] sm:$0xf] %v341
      %v344 = vmul.f32 %v332, %v338
      %v345 = vmul.f32 %v331, %v339
      %v346 = vadd.f32 %v344, 1e-07
      %v347 = vadd.f32 %v345, 1e-07
      %348 = vst [vmem:[#allocation3] sm:$0xf] %v346
      %349 = vst [vmem:[#allocation3 + $0x8] sm:$0xf] %v347
      %350 = vst [vmem:[#allocation1] ss:$2 sm:$0xff] %v216
      %v351 = vld.sshfl [vmem:[#allocation1] sm:$0xff pattern:$0x75316420]
      %v352 = vld.sshfl [vmem:[#allocation1 + $0x8] sm:$0xff pattern:$0x75316420]
      %355 = vrot.lane.b32.xlu0 %v351, 16
      %v356 = vpop.permute.xlu0 %355
      %357 = vrot.lane.b32.xlu0 %v352, 16
      %v358 = vpop.permute.xlu0 %357
      %vm359 = vcmp.lt.s32.totalorder %v317, 16
      %v360 = vsel %vm359, %v356, %v358
      %v361 = vsel %vm359, %v358, %v356
      %362 = vst [vmem:[#allocation1] ss:$2 sm:$0xff] %v226
      %v363 = vld.sshfl [vmem:[#allocation1] sm:$0xff pattern:$0x75316420]
      %v364 = vld.sshfl [vmem:[#allocation1 + $0x8] sm:$0xff pattern:$0x75316420]
      %367 = vrot.lane.b32.xlu0 %v363, 16
      %v368 = vpop.permute.xlu0 %367
      %369 = vrot.lane.b32.xlu0 %v364, 16
      %v370 = vpop.permute.xlu0 %369
      %v371 = vsel %vm359, %v368, %v370
      %v372 = vsel %vm359, %v370, %v368
      %v374 = vperm.slane %v256, 0
      %v375 = vperm.slane %v256, 2
      %v378 = vperm.slane %v374, 0
      %v379 = vperm.slane %v375, 0
      %v380 = vmul.f32 %v361, %v378
      %v381 = vmul.f32 %v360, %v379
      %v384 = vrot.slane %v380, 4
      %v385 = vrot.slane %v381, 4
      %388 = vst [vmem:[#allocation2] sm:$0xf0] %v384
      %389 = vst [vmem:[#allocation2 + $0x8] sm:$0xf0] %v385
      %v390 = vmul.f32 %v372, %v378
      %v391 = vmul.f32 %v371, %v379
      %v392 = vadd.f32 %v390, 1e-07
      %v393 = vadd.f32 %v391, 1e-07
      %v396 = vrot.slane %v392, 4
      %v397 = vrot.slane %v393, 4
      %400 = vst [vmem:[#allocation3] sm:$0xf0] %v396
      %401 = vst [vmem:[#allocation3 + $0x8] sm:$0xf0] %v397
      %402 = vst [vmem:[#allocation1] ss:$2 sm:$0xff] %v216
      %v403 = vld.sshfl [vmem:[#allocation1] sm:$0xff pattern:$0x75316420]
      %v404 = vld.sshfl [vmem:[#allocation1 + $0x8] sm:$0xff pattern:$0x75316420]
      %407 = vrot.lane.b32.xlu0 %v403, 15
      %v408 = vpop.permute.xlu0 %407
      %409 = vrot.lane.b32.xlu0 %v404, 15
      %v410 = vpop.permute.xlu0 %409
      %vm411 = vcmp.lt.s32.totalorder %v317, 15
      %v412 = vsel %vm411, %v408, %v410
      %v413 = vsel %vm411, %v410, %v408
      %414 = vst [vmem:[#allocation1] ss:$2 sm:$0xff] %v226
      %v415 = vld.sshfl [vmem:[#allocation1] sm:$0xff pattern:$0x75316420]
      %v416 = vld.sshfl [vmem:[#allocation1 + $0x8] sm:$0xff pattern:$0x75316420]
      %419 = vrot.lane.b32.xlu0 %v415, 15
      %v420 = vpop.permute.xlu0 %419
      %421 = vrot.lane.b32.xlu0 %v416, 15
      %v422 = vpop.permute.xlu0 %421
      %v423 = vsel %vm411, %v420, %v422
      %v424 = vsel %vm411, %v422, %v420
      %v426 = vperm.slane %v271, 0
      %v427 = vperm.slane %v271, 2
      %v430 = vperm.slane %v426, 0
      %v431 = vperm.slane %v427, 0
      %v432 = vmul.f32 %v413, %v430
      %v433 = vmul.f32 %v412, %v431
      %434 = vst [vmem:[#allocation2 + $0x10] sm:$0xf] %v432
      %435 = vst [vmem:[#allocation2 + $0x18] sm:$0xf] %v433
      %v436 = vmul.f32 %v424, %v430
      %v437 = vmul.f32 %v423, %v431
      %v438 = vadd.f32 %v436, 1e-07
      %v439 = vadd.f32 %v437, 1e-07
      %440 = vst [vmem:[#allocation3 + $0x10] sm:$0xf] %v438
      %441 = vst [vmem:[#allocation3 + $0x18] sm:$0xf] %v439
      %442 = vst [vmem:[#allocation1] ss:$2 sm:$0xff] %v216
      %v443 = vld.sshfl [vmem:[#allocation1] sm:$0xff pattern:$0x75316420]
      %v444 = vld.sshfl [vmem:[#allocation1 + $0x8] sm:$0xff pattern:$0x75316420]
      %447 = vrot.lane.b32.xlu0 %v443, 1
      %v448 = vpop.permute.xlu0 %447
      %449 = vrot.lane.b32.xlu0 %v444, 1
      %v450 = vpop.permute.xlu0 %449
      %vm451 = vcmp.lt.s32.totalorder %v317, 1
      %v452 = vsel %vm451, %v448, %v450
      %v453 = vsel %vm451, %v450, %v448
      %454 = vst [vmem:[#allocation1] ss:$2 sm:$0xff] %v226
      %v455 = vld.sshfl [vmem:[#allocation1] sm:$0xff pattern:$0x75316420]
      %v456 = vld.sshfl [vmem:[#allocation1 + $0x8] sm:$0xff pattern:$0x75316420]
      %459 = vrot.lane.b32.xlu0 %v455, 1
      %v460 = vpop.permute.xlu0 %459
      %461 = vrot.lane.b32.xlu0 %v456, 1
      %v462 = vpop.permute.xlu0 %461
      %v463 = vsel %vm451, %v460, %v462
      %v464 = vsel %vm451, %v462, %v460
      %v466 = vperm.slane %v276, 0
      %v467 = vperm.slane %v276, 2
      %v470 = vperm.slane %v466, 0
      %v471 = vperm.slane %v467, 0
      %v472 = vmul.f32 %v453, %v470
      %v473 = vmul.f32 %v452, %v471
      %v476 = vrot.slane %v472, 4
      %v477 = vrot.slane %v473, 4
      %480 = vst [vmem:[#allocation2 + $0x10] sm:$0xf0] %v476
      %481 = vst [vmem:[#allocation2 + $0x18] sm:$0xf0] %v477
      %v482 = vmul.f32 %v464, %v470
      %v483 = vmul.f32 %v463, %v471
      %v484 = vadd.f32 %v482, 1e-07
      %v485 = vadd.f32 %v483, 1e-07
      %v488 = vrot.slane %v484, 4
      %v489 = vrot.slane %v485, 4
      %492 = vst [vmem:[#allocation3 + $0x10] sm:$0xf0] %v488
      %493 = vst [vmem:[#allocation3 + $0x18] sm:$0xf0] %v489
      %v495 = vperm.slane %v280, 0
      %v496 = vperm.slane %v280, 2
      %v499 = vperm.slane %v495, 0
      %v500 = vperm.slane %v496, 0
      %v503 = vrot.slane %v500, 4
      %v504 = vsel %vm223, %v499, %v503
      %v506 = vmul.f32 %v216, %v504
      %508 = vst [vmem:[#allocation1] ss:$2 sm:$0xff] %v506
      %v509 = vld.sshfl [vmem:[#allocation1] sm:$0xff pattern:$0x75316420]
      %v510 = vld.sshfl [vmem:[#allocation1 + $0x8] sm:$0xff pattern:$0x75316420]
      %513 = vst [vmem:[#allocation2 + $0x20] sm:$0xf] %v509
      %514 = vst [vmem:[#allocation2 + $0x28] sm:$0xf] %v510
      %v515 = vmul.f32 %v226, %v504
      %v516 = vadd.f32 %v515, 1e-07
      %518 = vst [vmem:[#allocation1] ss:$2 sm:$0xff] %v516
      %v519 = vld.sshfl [vmem:[#allocation1] sm:$0xff pattern:$0x75316420]
      %v520 = vld.sshfl [vmem:[#allocation1 + $0x8] sm:$0xff pattern:$0x75316420]
      %523 = vst [vmem:[#allocation3 + $0x20] sm:$0xf] %v519
      %524 = vst [vmem:[#allocation3 + $0x28] sm:$0xf] %v520
      %525 = vst [vmem:[#allocation1] ss:$2 sm:$0xff] %v216
      %v526 = vld.sshfl [vmem:[#allocation1] sm:$0xff pattern:$0x75316420]
      %v527 = vld.sshfl [vmem:[#allocation1 + $0x8] sm:$0xff pattern:$0x75316420]
      %530 = vrot.lane.b32.xlu0 %v526, 127
      %v531 = vpop.permute.xlu0 %530
      %532 = vrot.lane.b32.xlu0 %v527, 127
      %v533 = vpop.permute.xlu0 %532
      %vm534 = vcmp.lt.s32.totalorder %v317, 127
      %v535 = vsel %vm534, %v531, %v533
      %v536 = vsel %vm534, %v533, %v531
      %537 = vst [vmem:[#allocation1] ss:$2 sm:$0xff] %v226
      %v538 = vld.sshfl [vmem:[#allocation1] sm:$0xff pattern:$0x75316420]
      %v539 = vld.sshfl [vmem:[#allocation1 + $0x8] sm:$0xff pattern:$0x75316420]
      %542 = vrot.lane.b32.xlu0 %v538, 127
      %v543 = vpop.permute.xlu0 %542
      %544 = vrot.lane.b32.xlu0 %v539, 127
      %v545 = vpop.permute.xlu0 %544
      %v546 = vsel %vm534, %v543, %v545
      %v547 = vsel %vm534, %v545, %v543
      %v549 = vperm.slane %v284, 0
      %v550 = vperm.slane %v284, 2
      %v553 = vperm.slane %v549, 0
      %v554 = vperm.slane %v550, 0
      %v555 = vmul.f32 %v535, %v553
      %v556 = vmul.f32 %v536, %v554
      %v559 = vrot.slane %v555, 4
      %v560 = vrot.slane %v556, 4
      %563 = vst [vmem:[#allocation2 + $0x20] sm:$0xf0] %v559
      %564 = vst [vmem:[#allocation2 + $0x28] sm:$0xf0] %v560
      %v565 = vmul.f32 %v546, %v553
      %v566 = vmul.f32 %v547, %v554
      %v567 = vadd.f32 %v565, 1e-07
      %v568 = vadd.f32 %v566, 1e-07
      %v571 = vrot.slane %v567, 4
      %v572 = vrot.slane %v568, 4
      %575 = vst [vmem:[#allocation3 + $0x20] sm:$0xf0] %v571
      %576 = vst [vmem:[#allocation3 + $0x28] sm:$0xf0] %v572
      %577 = vst [vmem:[#allocation1] ss:$2 sm:$0xff] %v216
      %v578 = vld.sshfl [vmem:[#allocation1] sm:$0xff pattern:$0x75316420]
      %v579 = vld.sshfl [vmem:[#allocation1 + $0x8] sm:$0xff pattern:$0x75316420]
      %582 = vrot.lane.b32.xlu0 %v578, 113
      %v583 = vpop.permute.xlu0 %582
      %584 = vrot.lane.b32.xlu0 %v579, 113
      %v585 = vpop.permute.xlu0 %584
      %vm586 = vcmp.lt.s32.totalorder %v317, 113
      %v587 = vsel %vm586, %v583, %v585
      %v588 = vsel %vm586, %v585, %v583
      %589 = vst [vmem:[#allocation1] ss:$2 sm:$0xff] %v226
      %v590 = vld.sshfl [vmem:[#allocation1] sm:$0xff pattern:$0x75316420]
      %v591 = vld.sshfl [vmem:[#allocation1 + $0x8] sm:$0xff pattern:$0x75316420]
      %594 = vrot.lane.b32.xlu0 %v590, 113
      %v595 = vpop.permute.xlu0 %594
      %596 = vrot.lane.b32.xlu0 %v591, 113
      %v597 = vpop.permute.xlu0 %596
      %v598 = vsel %vm586, %v595, %v597
      %v599 = vsel %vm586, %v597, %v595
      %v601 = vperm.slane %v289, 0
      %v602 = vperm.slane %v289, 2
      %v605 = vperm.slane %v601, 0
      %v606 = vperm.slane %v602, 0
      %v607 = vmul.f32 %v587, %v605
      %v608 = vmul.f32 %v588, %v606
      %609 = vst [vmem:[#allocation2 + $0x30] sm:$0xf] %v607
      %610 = vst [vmem:[#allocation2 + $0x38] sm:$0xf] %v608
      %v611 = vmul.f32 %v598, %v605
      %v612 = vmul.f32 %v599, %v606
      %v613 = vadd.f32 %v611, 1e-07
      %v614 = vadd.f32 %v612, 1e-07
      %615 = vst [vmem:[#allocation3 + $0x30] sm:$0xf] %v613
      %616 = vst [vmem:[#allocation3 + $0x38] sm:$0xf] %v614
      %617 = vst [vmem:[#allocation1] ss:$2 sm:$0xff] %v216
      %v618 = vld.sshfl [vmem:[#allocation1] sm:$0xff pattern:$0x75316420]
      %v619 = vld.sshfl [vmem:[#allocation1 + $0x8] sm:$0xff pattern:$0x75316420]
      %622 = vrot.lane.b32.xlu0 %v618, 112
      %v623 = vpop.permute.xlu0 %622
      %624 = vrot.lane.b32.xlu0 %v619, 112
      %v625 = vpop.permute.xlu0 %624
      %vm626 = vcmp.lt.s32.totalorder %v317, 112
      %v627 = vsel %vm626, %v623, %v625
      %v628 = vsel %vm626, %v625, %v623
      %629 = vst [vmem:[#allocation1] ss:$2 sm:$0xff] %v226
      %v630 = vld.sshfl [vmem:[#allocation1] sm:$0xff pattern:$0x75316420]
      %v631 = vld.sshfl [vmem:[#allocation1 + $0x8] sm:$0xff pattern:$0x75316420]
      %634 = vrot.lane.b32.xlu0 %v630, 112
      %v635 = vpop.permute.xlu0 %634
      %636 = vrot.lane.b32.xlu0 %v631, 112
      %v637 = vpop.permute.xlu0 %636
      %v638 = vsel %vm626, %v635, %v637
      %v639 = vsel %vm626, %v637, %v635
      %v641 = vperm.slane %v293, 0
      %v642 = vperm.slane %v293, 2
      %v645 = vperm.slane %v641, 0
      %v646 = vperm.slane %v642, 0
      %v647 = vmul.f32 %v627, %v645
      %v648 = vmul.f32 %v628, %v646
      %v651 = vrot.slane %v647, 4
      %v652 = vrot.slane %v648, 4
      %655 = vst [vmem:[#allocation2 + $0x30] sm:$0xf0] %v651
      %656 = vst [vmem:[#allocation2 + $0x38] sm:$0xf0] %v652
      %v657 = vmul.f32 %v638, %v645
      %v658 = vmul.f32 %v639, %v646
      %v659 = vadd.f32 %v657, 1e-07
      %v660 = vadd.f32 %v658, 1e-07
      %v663 = vrot.slane %v659, 4
      %v664 = vrot.slane %v660, 4
      %667 = vst [vmem:[#allocation3 + $0x30] sm:$0xf0] %v663
      %668 = vst [vmem:[#allocation3 + $0x38] sm:$0xf0] %v664
      %669 = vst [vmem:[#allocation1] ss:$2 sm:$0xff] %v216
      %v670 = vld.sshfl [vmem:[#allocation1] sm:$0xff pattern:$0x75316420]
      %v671 = vld.sshfl [vmem:[#allocation1 + $0x8] sm:$0xff pattern:$0x75316420]
      %674 = vrot.lane.b32.xlu0 %v670, 111
      %v675 = vpop.permute.xlu0 %674
      %676 = vrot.lane.b32.xlu0 %v671, 111
      %v677 = vpop.permute.xlu0 %676
      %vm678 = vcmp.lt.s32.totalorder %v317, 111
      %v679 = vsel %vm678, %v675, %v677
      %v680 = vsel %vm678, %v677, %v675
      %681 = vst [vmem:[#allocation1] ss:$2 sm:$0xff] %v226
      %v682 = vld.sshfl [vmem:[#allocation1] sm:$0xff pattern:$0x75316420]
      %v683 = vld.sshfl [vmem:[#allocation1 + $0x8] sm:$0xff pattern:$0x75316420]
      %686 = vrot.lane.b32.xlu0 %v682, 111
      %v687 = vpop.permute.xlu0 %686
      %688 = vrot.lane.b32.xlu0 %v683, 111
      %v689 = vpop.permute.xlu0 %688
      %v690 = vsel %vm678, %v687, %v689
      %v691 = vsel %vm678, %v689, %v687
      %v693 = vperm.slane %v297, 0
      %v694 = vperm.slane %v297, 2
      %v697 = vperm.slane %v693, 0
      %v698 = vperm.slane %v694, 0
      %v699 = vmul.f32 %v679, %v697
      %v700 = vmul.f32 %v680, %v698
      %701 = vst [vmem:[#allocation2 + $0x40] sm:$0xf] %v699
      %702 = vst [vmem:[#allocation2 + $0x48] sm:$0xf] %v700
      %v703 = vmul.f32 %v690, %v697
      %v704 = vmul.f32 %v691, %v698
      %v705 = vadd.f32 %v703, 1e-07
      %v706 = vadd.f32 %v704, 1e-07
      %707 = vst [vmem:[#allocation3 + $0x40] sm:$0xf] %v705
      %708 = vst [vmem:[#allocation3 + $0x48] sm:$0xf] %v706
      %v709 = vld [vmem:[#allocation2] sm:$0xff]
      %v710 = vld [vmem:[#allocation2 + $0x8] sm:$0xff]
      %v711 = vld [vmem:[#allocation2 + $0x10] sm:$0xff]
      %v712 = vld [vmem:[#allocation2 + $0x18] sm:$0xff]
      %v713 = vld [vmem:[#allocation2 + $0x20] sm:$0xff]
      %v714 = vld [vmem:[#allocation2 + $0x28] sm:$0xff]
      %v715 = vld [vmem:[#allocation2 + $0x30] sm:$0xff]
      %v716 = vld [vmem:[#allocation2 + $0x38] sm:$0xff]
      %v717 = vld [vmem:[#allocation2 + $0x40] sm:$0xff]
      %v718 = vld [vmem:[#allocation2 + $0x48] sm:$0xff]
      %v719 = vld [vmem:[#allocation2 + $0x50] sm:$0xff]
      %v720 = vld [vmem:[#allocation2 + $0x58] sm:$0xff]
      %721 = vrot.lane.b32.xlu0 %v709, 1
      %v722 = vpop.permute.xlu0 %721
      %723 = vrot.lane.b32.xlu0 %v711, 1
      %v724 = vpop.permute.xlu0 %723
      %725 = vrot.lane.b32.xlu0 %v713, 1
      %v726 = vpop.permute.xlu0 %725
      %727 = vrot.lane.b32.xlu0 %v715, 1
      %v728 = vpop.permute.xlu0 %727
      %729 = vrot.lane.b32.xlu0 %v717, 1
      %v730 = vpop.permute.xlu0 %729
      %731 = vrot.lane.b32.xlu0 %v719, 1
      %v732 = vpop.permute.xlu0 %731
      %733 = vrot.lane.b32.xlu0 %v710, 1
      %v734 = vpop.permute.xlu0 %733
      %735 = vrot.lane.b32.xlu0 %v712, 1
      %v736 = vpop.permute.xlu0 %735
      %737 = vrot.lane.b32.xlu0 %v714, 1
      %v738 = vpop.permute.xlu0 %737
      %739 = vrot.lane.b32.xlu0 %v716, 1
      %v740 = vpop.permute.xlu0 %739
      %741 = vrot.lane.b32.xlu0 %v718, 1
      %v742 = vpop.permute.xlu0 %741
      %743 = vrot.lane.b32.xlu0 %v720, 1
      %v744 = vpop.permute.xlu0 %743
      %v745 = vsel %vm451, %v722, %v734
      %v746 = vsel %vm451, %v724, %v736
      %v747 = vsel %vm451, %v726, %v738
      %v748 = vsel %vm451, %v728, %v740
      %v749 = vsel %vm451, %v730, %v742
      %v750 = vsel %vm451, %v732, %v744
      %v751 = vsel %vm451, %v734, %v722
      %v752 = vsel %vm451, %v736, %v724
      %v753 = vsel %vm451, %v738, %v726
      %v754 = vsel %vm451, %v740, %v728
      %v755 = vsel %vm451, %v742, %v730
      %v756 = vsel %vm451, %v744, %v732
      %v757 = vmul.f32 %v751, %v470
      %v758 = vmul.f32 %v745, %v471
      %v759 = vmul.f32 %v752, %v470
      %v760 = vmul.f32 %v746, %v471
      %v761 = vmul.f32 %v753, %v470
      %v762 = vmul.f32 %v747, %v471
      %v763 = vmul.f32 %v754, %v470
      %v764 = vmul.f32 %v748, %v471
      %v765 = vmul.f32 %v755, %v470
      %v766 = vmul.f32 %v749, %v471
      %v767 = vmul.f32 %v756, %v470
      %v768 = vmul.f32 %v750, %v471
      %v769 = vadd.f32 %v709, %v757
      %v770 = vadd.f32 %v710, %v758
      %v771 = vadd.f32 %v711, %v759
      %v772 = vadd.f32 %v712, %v760
      %v773 = vadd.f32 %v713, %v761
      %v774 = vadd.f32 %v714, %v762
      %v775 = vadd.f32 %v715, %v763
      %v776 = vadd.f32 %v716, %v764
      %v777 = vadd.f32 %v717, %v765
      %v778 = vadd.f32 %v718, %v766
      %v779 = vadd.f32 %v719, %v767
      %v780 = vadd.f32 %v720, %v768
      %781 = vrot.lane.b32.xlu0 %v709, 127
      %v782 = vpop.permute.xlu0 %781
      %783 = vrot.lane.b32.xlu0 %v711, 127
      %v784 = vpop.permute.xlu0 %783
      %785 = vrot.lane.b32.xlu0 %v713, 127
      %v786 = vpop.permute.xlu0 %785
      %787 = vrot.lane.b32.xlu0 %v715, 127
      %v788 = vpop.permute.xlu0 %787
      %789 = vrot.lane.b32.xlu0 %v717, 127
      %v790 = vpop.permute.xlu0 %789
      %791 = vrot.lane.b32.xlu0 %v719, 127
      %v792 = vpop.permute.xlu0 %791
      %793 = vrot.lane.b32.xlu0 %v710, 127
      %v794 = vpop.permute.xlu0 %793
      %795 = vrot.lane.b32.xlu0 %v712, 127
      %v796 = vpop.permute.xlu0 %795
      %797 = vrot.lane.b32.xlu0 %v714, 127
      %v798 = vpop.permute.xlu0 %797
      %799 = vrot.lane.b32.xlu0 %v716, 127
      %v800 = vpop.permute.xlu0 %799
      %801 = vrot.lane.b32.xlu0 %v718, 127
      %v802 = vpop.permute.xlu0 %801
      %803 = vrot.lane.b32.xlu0 %v720, 127
      %v804 = vpop.permute.xlu0 %803
      %v805 = vsel %vm534, %v782, %v794
      %v806 = vsel %vm534, %v784, %v796
      %v807 = vsel %vm534, %v786, %v798
      %v808 = vsel %vm534, %v788, %v800
      %v809 = vsel %vm534, %v790, %v802
      %v810 = vsel %vm534, %v792, %v804
      %v811 = vsel %vm534, %v794, %v782
      %v812 = vsel %vm534, %v796, %v784
      %v813 = vsel %vm534, %v798, %v786
      %v814 = vsel %vm534, %v800, %v788
      %v815 = vsel %vm534, %v802, %v790
      %v816 = vsel %vm534, %v804, %v792
      %v817 = vmul.f32 %v805, %v553
      %v818 = vmul.f32 %v811, %v554
      %v819 = vmul.f32 %v806, %v553
      %v820 = vmul.f32 %v812, %v554
      %v821 = vmul.f32 %v807, %v553
      %v822 = vmul.f32 %v813, %v554
      %v823 = vmul.f32 %v808, %v553
      %v824 = vmul.f32 %v814, %v554
      %v825 = vmul.f32 %v809, %v553
      %v826 = vmul.f32 %v815, %v554
      %v827 = vmul.f32 %v810, %v553
      %v828 = vmul.f32 %v816, %v554
      %v829 = vadd.f32 %v769, %v817
      %v830 = vadd.f32 %v770, %v818
      %v831 = vadd.f32 %v771, %v819
      %v832 = vadd.f32 %v772, %v820
      %v833 = vadd.f32 %v773, %v821
      %v834 = vadd.f32 %v774, %v822
      %v835 = vadd.f32 %v775, %v823
      %v836 = vadd.f32 %v776, %v824
      %v837 = vadd.f32 %v777, %v825
      %v838 = vadd.f32 %v778, %v826
      %v839 = vadd.f32 %v779, %v827
      %v840 = vadd.f32 %v780, %v828
      %841 = vrot.lane.b32.xlu0 %v829, 16
      %v842 = vpop.permute.xlu0 %841
      %843 = vrot.lane.b32.xlu0 %v831, 16
      %v844 = vpop.permute.xlu0 %843
      %845 = vrot.lane.b32.xlu0 %v833, 16
      %v846 = vpop.permute.xlu0 %845
      %847 = vrot.lane.b32.xlu0 %v835, 16
      %v848 = vpop.permute.xlu0 %847
      %849 = vrot.lane.b32.xlu0 %v837, 16
      %v850 = vpop.permute.xlu0 %849
      %851 = vrot.lane.b32.xlu0 %v839, 16
      %v852 = vpop.permute.xlu0 %851
      %853 = vrot.lane.b32.xlu0 %v830, 16
      %v854 = vpop.permute.xlu0 %853
      %855 = vrot.lane.b32.xlu0 %v832, 16
      %v856 = vpop.permute.xlu0 %855
      %857 = vrot.lane.b32.xlu0 %v834, 16
      %v858 = vpop.permute.xlu0 %857
      %859 = vrot.lane.b32.xlu0 %v836, 16
      %v860 = vpop.permute.xlu0 %859
      %861 = vrot.lane.b32.xlu0 %v838, 16
      %v862 = vpop.permute.xlu0 %861
      %863 = vrot.lane.b32.xlu0 %v840, 16
      %v864 = vpop.permute.xlu0 %863
      %v865 = vsel %vm359, %v842, %v854
      %v866 = vsel %vm359, %v844, %v856
      %v867 = vsel %vm359, %v846, %v858
      %v868 = vsel %vm359, %v848, %v860
      %v869 = vsel %vm359, %v850, %v862
      %v870 = vsel %vm359, %v852, %v864
      %v871 = vsel %vm359, %v854, %v842
      %v872 = vsel %vm359, %v856, %v844
      %v873 = vsel %vm359, %v858, %v846
      %v874 = vsel %vm359, %v860, %v848
      %v875 = vsel %vm359, %v862, %v850
      %v876 = vsel %vm359, %v864, %v852
      %v877 = vmul.f32 %v871, %v378
      %v878 = vmul.f32 %v865, %v379
      %v879 = vmul.f32 %v872, %v378
      %v880 = vmul.f32 %v866, %v379
      %v881 = vmul.f32 %v873, %v378
      %v882 = vmul.f32 %v867, %v379
      %v883 = vmul.f32 %v874, %v378
      %v884 = vmul.f32 %v868, %v379
      %v885 = vmul.f32 %v875, %v378
      %v886 = vmul.f32 %v869, %v379
      %v887 = vmul.f32 %v876, %v378
      %v888 = vmul.f32 %v870, %v379
      %v889 = vadd.f32 %v829, %v877
      %v890 = vadd.f32 %v830, %v878
      %v891 = vadd.f32 %v831, %v879
      %v892 = vadd.f32 %v832, %v880
      %v893 = vadd.f32 %v833, %v881
      %v894 = vadd.f32 %v834, %v882
      %v895 = vadd.f32 %v835, %v883
      %v896 = vadd.f32 %v836, %v884
      %v897 = vadd.f32 %v837, %v885
      %v898 = vadd.f32 %v838, %v886
      %v899 = vadd.f32 %v839, %v887
      %v900 = vadd.f32 %v840, %v888
      %901 = vrot.lane.b32.xlu0 %v829, 112
      %v902 = vpop.permute.xlu0 %901
      %903 = vrot.lane.b32.xlu0 %v831, 112
      %v904 = vpop.permute.xlu0 %903
      %905 = vrot.lane.b32.xlu0 %v833, 112
      %v906 = vpop.permute.xlu0 %905
      %907 = vrot.lane.b32.xlu0 %v835, 112
      %v908 = vpop.permute.xlu0 %907
      %909 = vrot.lane.b32.xlu0 %v837, 112
      %v910 = vpop.permute.xlu0 %909
      %911 = vrot.lane.b32.xlu0 %v839, 112
      %v912 = vpop.permute.xlu0 %911
      %913 = vrot.lane.b32.xlu0 %v830, 112
      %v914 = vpop.permute.xlu0 %913
      %915 = vrot.lane.b32.xlu0 %v832, 112
      %v916 = vpop.permute.xlu0 %915
      %917 = vrot.lane.b32.xlu0 %v834, 112
      %v918 = vpop.permute.xlu0 %917
      %919 = vrot.lane.b32.xlu0 %v836, 112
      %v920 = vpop.permute.xlu0 %919
      %921 = vrot.lane.b32.xlu0 %v838, 112
      %v922 = vpop.permute.xlu0 %921
      %923 = vrot.lane.b32.xlu0 %v840, 112
      %v924 = vpop.permute.xlu0 %923
      %v925 = vsel %vm626, %v902, %v914
      %v926 = vsel %vm626, %v904, %v916
      %v927 = vsel %vm626, %v906, %v918
      %v928 = vsel %vm626, %v908, %v920
      %v929 = vsel %vm626, %v910, %v922
      %v930 = vsel %vm626, %v912, %v924
      %v931 = vsel %vm626, %v914, %v902
      %v932 = vsel %vm626, %v916, %v904
      %v933 = vsel %vm626, %v918, %v906
      %v934 = vsel %vm626, %v920, %v908
      %v935 = vsel %vm626, %v922, %v910
      %v936 = vsel %vm626, %v924, %v912
      %v937 = vmul.f32 %v925, %v645
      %v938 = vmul.f32 %v931, %v646
      %v939 = vmul.f32 %v926, %v645
      %v940 = vmul.f32 %v932, %v646
      %v941 = vmul.f32 %v927, %v645
      %v942 = vmul.f32 %v933, %v646
      %v943 = vmul.f32 %v928, %v645
      %v944 = vmul.f32 %v934, %v646
      %v945 = vmul.f32 %v929, %v645
      %v946 = vmul.f32 %v935, %v646
      %v947 = vmul.f32 %v930, %v645
      %v948 = vmul.f32 %v936, %v646
      %v949 = vadd.f32 %v889, %v937
      %v950 = vadd.f32 %v890, %v938
      %v951 = vadd.f32 %v891, %v939
      %v952 = vadd.f32 %v892, %v940
      %v953 = vadd.f32 %v893, %v941
      %v954 = vadd.f32 %v894, %v942
      %v955 = vadd.f32 %v895, %v943
      %v956 = vadd.f32 %v896, %v944
      %v957 = vadd.f32 %v897, %v945
      %v958 = vadd.f32 %v898, %v946
      %v959 = vadd.f32 %v899, %v947
      %v960 = vadd.f32 %v900, %v948
      %v961 = vld [vmem:[#allocation3] sm:$0xff]
      %v962 = vld [vmem:[#allocation3 + $0x8] sm:$0xff]
      %v963 = vld [vmem:[#allocation3 + $0x10] sm:$0xff]
      %v964 = vld [vmem:[#allocation3 + $0x18] sm:$0xff]
      %v965 = vld [vmem:[#allocation3 + $0x20] sm:$0xff]
      %v966 = vld [vmem:[#allocation3 + $0x28] sm:$0xff]
      %v967 = vld [vmem:[#allocation3 + $0x30] sm:$0xff]
      %v968 = vld [vmem:[#allocation3 + $0x38] sm:$0xff]
      %v969 = vld [vmem:[#allocation3 + $0x40] sm:$0xff]
      %v970 = vld [vmem:[#allocation3 + $0x48] sm:$0xff]
      %v971 = vld [vmem:[#allocation3 + $0x50] sm:$0xff]
      %v972 = vld [vmem:[#allocation3 + $0x58] sm:$0xff]
      %v973 = vmul.f32 %v961, %v961
      %v974 = vmul.f32 %v962, %v962
      %v975 = vmul.f32 %v963, %v963
      %v976 = vmul.f32 %v964, %v964
      %v977 = vmul.f32 %v965, %v965
      %v978 = vmul.f32 %v966, %v966
      %v979 = vmul.f32 %v967, %v967
      %v980 = vmul.f32 %v968, %v968
      %v981 = vmul.f32 %v969, %v969
      %v982 = vmul.f32 %v970, %v970
      %v983 = vmul.f32 %v971, %v971
      %v984 = vmul.f32 %v972, %v972
      %v985 = vadd.f32 %v973, %v975
      %v986 = vadd.f32 %v985, %v977
      %v987 = vadd.f32 %v986, %v979
      %v988 = vadd.f32 %v987, %v981
      %v989 = vadd.f32 %v988, %v983
      %v990 = vrot.slane %v989, 4
      %v991 = vadd.f32 %v989, %v990
      %v992 = vrot.slane %v991, 2
      %v993 = vadd.f32 %v991, %v992
      %v994 = vrot.slane %v993, 1
      %v995 = vadd.f32 %v993, %v994
      %v996 = vadd.f32 %v974, %v976
      %v997 = vadd.f32 %v996, %v978
      %v998 = vadd.f32 %v997, %v980
      %v999 = vadd.f32 %v998, %v982
      %v1000 = vadd.f32 %v999, %v984
      %v1001 = vrot.slane %v1000, 4
      %v1002 = vadd.f32 %v1000, %v1001
      %v1003 = vrot.slane %v1002, 2
      %v1004 = vadd.f32 %v1002, %v1003
      %v1005 = vrot.slane %v1004, 1
      %v1006 = vadd.f32 %v1004, %v1005
      %v1007 = vrsqrt.pop %v995
      %v1008 = vmul.f32 %v1007, %v995
      %v1009 = vmul.f32 %v1008, %v1007
      %v1010 = vmul.f32 0.5, %v1009
      %v1011 = vsub.f32 1.5, %v1010
      %v1012 = vmul.f32 %v1007, %v1011
      %vm1013 = vweird.f32 %v995
      %vm1014 = vweird.f32 %v1007
      %vm1015 = vmor %vm1013, %vm1014
      %v1016 = vsel %vm1015, %v1007, %v1012
      %v1017 = vrsqrt.pop %v1006
      %v1018 = vmul.f32 %v1017, %v1006
      %v1019 = vmul.f32 %v1018, %v1017
      %v1020 = vmul.f32 0.5, %v1019
      %v1021 = vsub.f32 1.5, %v1020
      %v1022 = vmul.f32 %v1017, %v1021
      %vm1023 = vweird.f32 %v1006
      %vm1024 = vweird.f32 %v1017
      %vm1025 = vmor %vm1023, %vm1024
      %v1026 = vsel %vm1025, %v1017, %v1022
      %v1027 = vmul.f32 %v961, %v1016
      %v1028 = vmul.f32 %v962, %v1026
      %v1029 = vmul.f32 %v963, %v1016
      %v1030 = vmul.f32 %v964, %v1026
      %v1031 = vmul.f32 %v965, %v1016
      %v1032 = vmul.f32 %v966, %v1026
      %v1033 = vmul.f32 %v967, %v1016
      %v1034 = vmul.f32 %v968, %v1026
      %v1035 = vmul.f32 %v969, %v1016
      %v1036 = vmul.f32 %v970, %v1026
      %v1037 = vmul.f32 %v971, %v1016
      %v1038 = vmul.f32 %v972, %v1026
      %1039 = vxpose.xlu0.b32.start [1/16] %v1027, 128
      %1040 = vxpose.xlu0.b32.cont [2/16] %v1029, 128
      %1041 = vxpose.xlu0.b32.cont [3/16] %v1031, 128
      %1042 = vxpose.xlu0.b32.cont [4/16] %v1033, 128
      %1043 = vxpose.xlu0.b32.cont [5/16] %v1035, 128
      %1044 = vxpose.xlu0.b32.cont [6/16] %v1037, 128
      %1045 = vxpose.xlu0.b32.cont [7/16] 0.0, 128
      %1046 = vxpose.xlu0.b32.cont [8/16] 0.0, 128
      %1047 = vxpose.xlu0.b32.cont [9/16] 0.0, 128
      %1048 = vxpose.xlu0.b32.cont [10/16] 0.0, 128
      %1049 = vxpose.xlu0.b32.cont [11/16] 0.0, 128
      %1050 = vxpose.xlu0.b32.cont [12/16] 0.0, 128
      %1051 = vxpose.xlu0.b32.cont [13/16] 0.0, 128
      %1052 = vxpose.xlu0.b32.cont [14/16] 0.0, 128
      %1053 = vxpose.xlu0.b32.cont [15/16] 0.0, 128
      %1054 = vxpose.xlu0.b32.end [16/16] 0.0, 128
      %v1055 = vpop.trf.xlu0
      %v1056 = vpop.trf.xlu0
      %v1057 = vpop.trf.xlu0
      %v1058 = vpop.trf.xlu0
      %v1059 = vpop.trf.xlu0
      %v1060 = vpop.trf.xlu0
      %v1061 = vpop.trf.xlu0
      %v1062 = vpop.trf.xlu0
      %v1063 = vpop.trf.xlu0
      %v1064 = vpop.trf.xlu0
      %v1065 = vpop.trf.xlu0
      %v1066 = vpop.trf.xlu0
      %v1067 = vpop.trf.xlu0
      %v1068 = vpop.trf.xlu0
      %v1069 = vpop.trf.xlu0
      %v1070 = vpop.trf.xlu0
      %1071 = vxpose.xlu0.b32.start [1/16] %v1028, 128
      %1072 = vxpose.xlu0.b32.cont [2/16] %v1030, 128
      %1073 = vxpose.xlu0.b32.cont [3/16] %v1032, 128
      %1074 = vxpose.xlu0.b32.cont [4/16] %v1034, 128
      %1075 = vxpose.xlu0.b32.cont [5/16] %v1036, 128
      %1076 = vxpose.xlu0.b32.cont [6/16] %v1038, 128
      %1077 = vxpose.xlu0.b32.cont [7/16] 0.0, 128
      %1078 = vxpose.xlu0.b32.cont [8/16] 0.0, 128
      %1079 = vxpose.xlu0.b32.cont [9/16] 0.0, 128
      %1080 = vxpose.xlu0.b32.cont [10/16] 0.0, 128
      %1081 = vxpose.xlu0.b32.cont [11/16] 0.0, 128
      %1082 = vxpose.xlu0.b32.cont [12/16] 0.0, 128
      %1083 = vxpose.xlu0.b32.cont [13/16] 0.0, 128
      %1084 = vxpose.xlu0.b32.cont [14/16] 0.0, 128
      %1085 = vxpose.xlu0.b32.cont [15/16] 0.0, 128
      %1086 = vxpose.xlu0.b32.end [16/16] 0.0, 128
      %v1087 = vpop.trf.xlu0
      %v1088 = vpop.trf.xlu0
      %v1089 = vpop.trf.xlu0
      %v1090 = vpop.trf.xlu0
      %v1091 = vpop.trf.xlu0
      %v1092 = vpop.trf.xlu0
      %v1093 = vpop.trf.xlu0
      %v1094 = vpop.trf.xlu0
      %v1095 = vpop.trf.xlu0
      %v1096 = vpop.trf.xlu0
      %v1097 = vpop.trf.xlu0
      %v1098 = vpop.trf.xlu0
      %v1099 = vpop.trf.xlu0
      %v1100 = vpop.trf.xlu0
      %v1101 = vpop.trf.xlu0
      %v1102 = vpop.trf.xlu0
      %v1103 = vpack.c.bf16 %v1056, %v1055
      %v1104 = vpack.c.bf16 %v1058, %v1057
      %v1105 = vpack.c.bf16 %v1060, %v1059
      %v1106 = vpack.c.bf16 %v1062, %v1061
      %v1107 = vpack.c.bf16 %v1064, %v1063
      %v1108 = vpack.c.bf16 %v1066, %v1065
      %v1109 = vpack.c.bf16 %v1068, %v1067
      %v1110 = vpack.c.bf16 %v1070, %v1069
      %v1111 = vpack.c.bf16 %v1088, %v1087
      %v1112 = vpack.c.bf16 %v1090, %v1089
      %v1113 = vpack.c.bf16 %v1092, %v1091
      %v1114 = vpack.c.bf16 %v1094, %v1093
      %v1115 = vpack.c.bf16 %v1096, %v1095
      %v1116 = vpack.c.bf16 %v1098, %v1097
      %v1117 = vpack.c.bf16 %v1100, %v1099
      %v1118 = vpack.c.bf16 %v1102, %v1101
      %v1119 = vpack.c.bf16 %v951, %v949
      %v1120 = vpack.c.bf16 %v952, %v950
      %v1121 = vpack.c.bf16 %v955, %v953
      %v1122 = vpack.c.bf16 %v956, %v954
      %v1123 = vpack.c.bf16 %v959, %v957
      %v1124 = vpack.c.bf16 %v960, %v958
      %vm1125 = vcmask 392192
      %v1127 = vsel %vm1125, %v1103, 0
      %v1130 = vsel %vm1125, %v1104, 0
      %v1133 = vsel %vm1125, %v1105, 0
      %v1136 = vsel %vm1125, %v1106, 0
      %v1139 = vsel %vm1125, %v1107, 0
      %v1142 = vsel %vm1125, %v1108, 0
      %v1145 = vsel %vm1125, %v1109, 0
      %v1148 = vsel %vm1125, %v1110, 0
      %v1151 = vsel %vm1125, %v1111, 0
      %v1154 = vsel %vm1125, %v1112, 0
      %v1157 = vsel %vm1125, %v1113, 0
      %v1160 = vsel %vm1125, %v1114, 0
      %v1163 = vsel %vm1125, %v1115, 0
      %v1166 = vsel %vm1125, %v1116, 0
      %v1169 = vsel %vm1125, %v1117, 0
      %v1172 = vsel %vm1125, %v1118, 0
      %1174 = vmatpush.bf16.msra.mxu0 0
      %1175 = vmatpush.bf16.msra.mxu0 0
      %1176 = vmatpush.bf16.msra.mxu0 0
      %1177 = vmatpush.bf16.msra.mxu0 0
      %1178 = vmatpush.bf16.msra.mxu0 0
      %1179 = vmatpush.bf16.msra.mxu0 %v1123
      %1180 = vmatpush.bf16.msra.mxu0 %v1121
      %1181 = vmatpush.bf16.msra.mxu0 %v1119
      %1182 = vmatmul.bf16.gmra.mxu0 %v1127
      %v1183 = vpop.f32.mrf.mxu0
      %v1184 = vadd.f32 0.0, %v1183
      %v1185 = vpop.f32.mrf.mxu0
      %v1186 = vadd.f32 0.0, %v1185
      %1187 = vmatmul.bf16.gmra.mxu0 %v1130
      %v1188 = vpop.f32.mrf.mxu0
      %v1189 = vadd.f32 0.0, %v1188
      %v1190 = vpop.f32.mrf.mxu0
      %v1191 = vadd.f32 0.0, %v1190
      %1192 = vmatmul.bf16.gmra.mxu0 %v1133
      %v1193 = vpop.f32.mrf.mxu0
      %v1194 = vadd.f32 0.0, %v1193
      %v1195 = vpop.f32.mrf.mxu0
      %v1196 = vadd.f32 0.0, %v1195
      %1197 = vmatmul.bf16.gmra.mxu0 %v1136
      %v1198 = vpop.f32.mrf.mxu0
      %v1199 = vadd.f32 0.0, %v1198
      %v1200 = vpop.f32.mrf.mxu0
      %v1201 = vadd.f32 0.0, %v1200
      %1202 = vmatmul.bf16.gmra.mxu0 %v1139
      %v1203 = vpop.f32.mrf.mxu0
      %v1204 = vadd.f32 0.0, %v1203
      %v1205 = vpop.f32.mrf.mxu0
      %v1206 = vadd.f32 0.0, %v1205
      %1207 = vmatmul.bf16.gmra.mxu0 %v1142
      %v1208 = vpop.f32.mrf.mxu0
      %v1209 = vadd.f32 0.0, %v1208
      %v1210 = vpop.f32.mrf.mxu0
      %v1211 = vadd.f32 0.0, %v1210
      %1212 = vmatmul.bf16.gmra.mxu0 %v1145
      %v1213 = vpop.f32.mrf.mxu0
      %v1214 = vadd.f32 0.0, %v1213
      %v1215 = vpop.f32.mrf.mxu0
      %v1216 = vadd.f32 0.0, %v1215
      %1217 = vmatmul.bf16.gmra.mxu0 %v1148
      %v1218 = vpop.f32.mrf.mxu0
      %v1219 = vadd.f32 0.0, %v1218
      %v1220 = vpop.f32.mrf.mxu0
      %v1221 = vadd.f32 0.0, %v1220
      %1222 = vmatmul.bf16.gmra.mxu0 %v1151
      %v1223 = vpop.f32.mrf.mxu0
      %v1224 = vadd.f32 0.0, %v1223
      %v1225 = vpop.f32.mrf.mxu0
      %v1226 = vadd.f32 0.0, %v1225
      %1227 = vmatmul.bf16.gmra.mxu0 %v1154
      %v1228 = vpop.f32.mrf.mxu0
      %v1229 = vadd.f32 0.0, %v1228
      %v1230 = vpop.f32.mrf.mxu0
      %v1231 = vadd.f32 0.0, %v1230
      %1232 = vmatmul.bf16.gmra.mxu0 %v1157
      %v1233 = vpop.f32.mrf.mxu0
      %v1234 = vadd.f32 0.0, %v1233
      %v1235 = vpop.f32.mrf.mxu0
      %v1236 = vadd.f32 0.0, %v1235
      %1237 = vmatmul.bf16.gmra.mxu0 %v1160
      %v1238 = vpop.f32.mrf.mxu0
      %v1239 = vadd.f32 0.0, %v1238
      %v1240 = vpop.f32.mrf.mxu0
      %v1241 = vadd.f32 0.0, %v1240
      %1242 = vmatmul.bf16.gmra.mxu0 %v1163
      %v1243 = vpop.f32.mrf.mxu0
      %v1244 = vadd.f32 0.0, %v1243
      %v1245 = vpop.f32.mrf.mxu0
      %v1246 = vadd.f32 0.0, %v1245
      %1247 = vmatmul.bf16.gmra.mxu0 %v1166
      %v1248 = vpop.f32.mrf.mxu0
      %v1249 = vadd.f32 0.0, %v1248
      %v1250 = vpop.f32.mrf.mxu0
      %v1251 = vadd.f32 0.0, %v1250
      %1252 = vmatmul.bf16.gmra.mxu0 %v1169
      %v1253 = vpop.f32.mrf.mxu0
      %v1254 = vadd.f32 0.0, %v1253
      %v1255 = vpop.f32.mrf.mxu0
      %v1256 = vadd.f32 0.0, %v1255
      %1257 = vmatmul.bf16.gmra.mxu0 %v1172
      %v1258 = vpop.f32.mrf.mxu0
      %v1259 = vadd.f32 0.0, %v1258
      %v1260 = vpop.f32.mrf.mxu0
      %v1261 = vadd.f32 0.0, %v1260
      %1262 = vdwg.mxu0
      %1263 = vmatpush.bf16.msra.mxu0 0
      %1264 = vmatpush.bf16.msra.mxu0 0
      %1265 = vmatpush.bf16.msra.mxu0 0
      %1266 = vmatpush.bf16.msra.mxu0 0
      %1267 = vmatpush.bf16.msra.mxu0 0
      %1268 = vmatpush.bf16.msra.mxu0 %v1124
      %1269 = vmatpush.bf16.msra.mxu0 %v1122
      %1270 = vmatpush.bf16.msra.mxu0 %v1120
      %1271 = vmatmul.bf16.gmra.mxu0 %v1127
      %v1272 = vpop.f32.mrf.mxu0
      %v1273 = vadd.f32 0.0, %v1272
      %v1274 = vpop.f32.mrf.mxu0
      %v1275 = vadd.f32 0.0, %v1274
      %1276 = vmatmul.bf16.gmra.mxu0 %v1130
      %v1277 = vpop.f32.mrf.mxu0
      %v1278 = vadd.f32 0.0, %v1277
      %v1279 = vpop.f32.mrf.mxu0
      %v1280 = vadd.f32 0.0, %v1279
      %1281 = vmatmul.bf16.gmra.mxu0 %v1133
      %v1282 = vpop.f32.mrf.mxu0
      %v1283 = vadd.f32 0.0, %v1282
      %v1284 = vpop.f32.mrf.mxu0
      %v1285 = vadd.f32 0.0, %v1284
      %1286 = vmatmul.bf16.gmra.mxu0 %v1136
      %v1287 = vpop.f32.mrf.mxu0
      %v1288 = vadd.f32 0.0, %v1287
      %v1289 = vpop.f32.mrf.mxu0
      %v1290 = vadd.f32 0.0, %v1289
      %1291 = vmatmul.bf16.gmra.mxu0 %v1139
      %v1292 = vpop.f32.mrf.mxu0
      %v1293 = vadd.f32 0.0, %v1292
      %v1294 = vpop.f32.mrf.mxu0
      %v1295 = vadd.f32 0.0, %v1294
      %1296 = vmatmul.bf16.gmra.mxu0 %v1142
      %v1297 = vpop.f32.mrf.mxu0
      %v1298 = vadd.f32 0.0, %v1297
      %v1299 = vpop.f32.mrf.mxu0
      %v1300 = vadd.f32 0.0, %v1299
      %1301 = vmatmul.bf16.gmra.mxu0 %v1145
      %v1302 = vpop.f32.mrf.mxu0
      %v1303 = vadd.f32 0.0, %v1302
      %v1304 = vpop.f32.mrf.mxu0
      %v1305 = vadd.f32 0.0, %v1304
      %1306 = vmatmul.bf16.gmra.mxu0 %v1148
      %v1307 = vpop.f32.mrf.mxu0
      %v1308 = vadd.f32 0.0, %v1307
      %v1309 = vpop.f32.mrf.mxu0
      %v1310 = vadd.f32 0.0, %v1309
      %1311 = vmatmul.bf16.gmra.mxu0 %v1151
      %v1312 = vpop.f32.mrf.mxu0
      %v1313 = vadd.f32 0.0, %v1312
      %v1314 = vpop.f32.mrf.mxu0
      %v1315 = vadd.f32 0.0, %v1314
      %1316 = vmatmul.bf16.gmra.mxu0 %v1154
      %v1317 = vpop.f32.mrf.mxu0
      %v1318 = vadd.f32 0.0, %v1317
      %v1319 = vpop.f32.mrf.mxu0
      %v1320 = vadd.f32 0.0, %v1319
      %1321 = vmatmul.bf16.gmra.mxu0 %v1157
      %v1322 = vpop.f32.mrf.mxu0
      %v1323 = vadd.f32 0.0, %v1322
      %v1324 = vpop.f32.mrf.mxu0
      %v1325 = vadd.f32 0.0, %v1324
      %1326 = vmatmul.bf16.gmra.mxu0 %v1160
      %v1327 = vpop.f32.mrf.mxu0
      %v1328 = vadd.f32 0.0, %v1327
      %v1329 = vpop.f32.mrf.mxu0
      %v1330 = vadd.f32 0.0, %v1329
      %1331 = vmatmul.bf16.gmra.mxu0 %v1163
      %v1332 = vpop.f32.mrf.mxu0
      %v1333 = vadd.f32 0.0, %v1332
      %v1334 = vpop.f32.mrf.mxu0
      %v1335 = vadd.f32 0.0, %v1334
      %1336 = vmatmul.bf16.gmra.mxu0 %v1166
      %v1337 = vpop.f32.mrf.mxu0
      %v1338 = vadd.f32 0.0, %v1337
      %v1339 = vpop.f32.mrf.mxu0
      %v1340 = vadd.f32 0.0, %v1339
      %1341 = vmatmul.bf16.gmra.mxu0 %v1169
      %v1342 = vpop.f32.mrf.mxu0
      %v1343 = vadd.f32 0.0, %v1342
      %v1344 = vpop.f32.mrf.mxu0
      %v1345 = vadd.f32 0.0, %v1344
      %1346 = vmatmul.bf16.gmra.mxu0 %v1172
      %v1347 = vpop.f32.mrf.mxu0
      %v1348 = vadd.f32 0.0, %v1347
      %v1349 = vpop.f32.mrf.mxu0
      %v1350 = vadd.f32 0.0, %v1349
      %1351 = vdwg.mxu0
      %v1352 = vmax.f32 %v1184, %v1189
      %v1353 = vmax.f32 %v1186, %v1191
      %v1354 = vmax.f32 %v1352, %v1194
      %v1355 = vmax.f32 %v1353, %v1196
      %v1356 = vmax.f32 %v1354, %v1199
      %v1357 = vmax.f32 %v1355, %v1201
      %v1358 = vmax.f32 %v1356, %v1204
      %v1359 = vmax.f32 %v1357, %v1206
      %v1360 = vmax.f32 %v1358, %v1209
      %v1361 = vmax.f32 %v1359, %v1211
      %v1362 = vmax.f32 %v1360, %v1214
      %v1363 = vmax.f32 %v1361, %v1216
      %v1364 = vmax.f32 %v1362, %v1219
      %v1365 = vmax.f32 %v1363, %v1221
      %v1366 = vmax.f32 %v1364, %v1224
      %v1367 = vmax.f32 %v1365, %v1226
      %v1368 = vmax.f32 %v1366, %v1229
      %v1369 = vmax.f32 %v1367, %v1231
      %v1370 = vmax.f32 %v1368, %v1234
      %v1371 = vmax.f32 %v1369, %v1236
      %v1372 = vmax.f32 %v1370, %v1239
      %v1373 = vmax.f32 %v1371, %v1241
      %v1374 = vmax.f32 %v1372, %v1244
      %v1375 = vmax.f32 %v1373, %v1246
      %v1376 = vmax.f32 %v1374, %v1249
      %v1377 = vmax.f32 %v1375, %v1251
      %v1378 = vmax.f32 %v1376, %v1254
      %v1379 = vmax.f32 %v1377, %v1256
      %v1380 = vmax.f32 %v1378, %v1259
      %v1381 = vmax.f32 %v1379, %v1261
      %v1382 = vmax.f32 %v1380, %v1381
      %v1383 = vrot.slane %v1382, 4
      %v1384 = vmax.f32 %v1382, %v1383
      %v1385 = vrot.slane %v1384, 2
      %v1386 = vmax.f32 %v1384, %v1385
      %v1387 = vrot.slane %v1386, 1
      %v1388 = vmax.f32 %v1386, %v1387
      %v1389 = vmax.f32 %v1273, %v1278
      %v1390 = vmax.f32 %v1275, %v1280
      %v1391 = vmax.f32 %v1389, %v1283
      %v1392 = vmax.f32 %v1390, %v1285
      %v1393 = vmax.f32 %v1391, %v1288
      %v1394 = vmax.f32 %v1392, %v1290
      %v1395 = vmax.f32 %v1393, %v1293
      %v1396 = vmax.f32 %v1394, %v1295
      %v1397 = vmax.f32 %v1395, %v1298
      %v1398 = vmax.f32 %v1396, %v1300
      %v1399 = vmax.f32 %v1397, %v1303
      %v1400 = vmax.f32 %v1398, %v1305
      %v1401 = vmax.f32 %v1399, %v1308
      %v1402 = vmax.f32 %v1400, %v1310
      %v1403 = vmax.f32 %v1401, %v1313
      %v1404 = vmax.f32 %v1402, %v1315
      %v1405 = vmax.f32 %v1403, %v1318
      %v1406 = vmax.f32 %v1404, %v1320
      %v1407 = vmax.f32 %v1405, %v1323
      %v1408 = vmax.f32 %v1406, %v1325
      %v1409 = vmax.f32 %v1407, %v1328
      %v1410 = vmax.f32 %v1408, %v1330
      %v1411 = vmax.f32 %v1409, %v1333
      %v1412 = vmax.f32 %v1410, %v1335
      %v1413 = vmax.f32 %v1411, %v1338
      %v1414 = vmax.f32 %v1412, %v1340
      %v1415 = vmax.f32 %v1413, %v1343
      %v1416 = vmax.f32 %v1414, %v1345
      %v1417 = vmax.f32 %v1415, %v1348
      %v1418 = vmax.f32 %v1416, %v1350
      %v1419 = vmax.f32 %v1417, %v1418
      %v1420 = vrot.slane %v1419, 4
      %v1421 = vmax.f32 %v1419, %v1420
      %v1422 = vrot.slane %v1421, 2
      %v1423 = vmax.f32 %v1421, %v1422
      %v1424 = vrot.slane %v1423, 1
      %v1425 = vmax.f32 %v1423, %v1424
      %v1426 = vsub.f32 %v1184, %v1388
      %v1427 = vsub.f32 %v1273, %v1425
      %v1428 = vsub.f32 %v1186, %v1388
      %v1429 = vsub.f32 %v1275, %v1425
      %v1430 = vsub.f32 %v1189, %v1388
      %v1431 = vsub.f32 %v1278, %v1425
      %v1432 = vsub.f32 %v1191, %v1388
      %v1433 = vsub.f32 %v1280, %v1425
      %v1434 = vsub.f32 %v1194, %v1388
      %v1435 = vsub.f32 %v1283, %v1425
      %v1436 = vsub.f32 %v1196, %v1388
      %v1437 = vsub.f32 %v1285, %v1425
      %v1438 = vsub.f32 %v1199, %v1388
      %v1439 = vsub.f32 %v1288, %v1425
      %v1440 = vsub.f32 %v1201, %v1388
      %v1441 = vsub.f32 %v1290, %v1425
      %v1442 = vsub.f32 %v1204, %v1388
      %v1443 = vsub.f32 %v1293, %v1425
      %v1444 = vsub.f32 %v1206, %v1388
      %v1445 = vsub.f32 %v1295, %v1425
      %v1446 = vsub.f32 %v1209, %v1388
      %v1447 = vsub.f32 %v1298, %v1425
      %v1448 = vsub.f32 %v1211, %v1388
      %v1449 = vsub.f32 %v1300, %v1425
      %v1450 = vsub.f32 %v1214, %v1388
      %v1451 = vsub.f32 %v1303, %v1425
      %v1452 = vsub.f32 %v1216, %v1388
      %v1453 = vsub.f32 %v1305, %v1425
      %v1454 = vsub.f32 %v1219, %v1388
      %v1455 = vsub.f32 %v1308, %v1425
      %v1456 = vsub.f32 %v1221, %v1388
      %v1457 = vsub.f32 %v1310, %v1425
      %v1458 = vsub.f32 %v1224, %v1388
      %v1459 = vsub.f32 %v1313, %v1425
      %v1460 = vsub.f32 %v1226, %v1388
      %v1461 = vsub.f32 %v1315, %v1425
      %v1462 = vsub.f32 %v1229, %v1388
      %v1463 = vsub.f32 %v1318, %v1425
      %v1464 = vsub.f32 %v1231, %v1388
      %v1465 = vsub.f32 %v1320, %v1425
      %v1466 = vsub.f32 %v1234, %v1388
      %v1467 = vsub.f32 %v1323, %v1425
      %v1468 = vsub.f32 %v1236, %v1388
      %v1469 = vsub.f32 %v1325, %v1425
      %v1470 = vsub.f32 %v1239, %v1388
      %v1471 = vsub.f32 %v1328, %v1425
      %v1472 = vsub.f32 %v1241, %v1388
      %v1473 = vsub.f32 %v1330, %v1425
      %v1474 = vsub.f32 %v1244, %v1388
      %v1475 = vsub.f32 %v1333, %v1425
      %v1476 = vsub.f32 %v1246, %v1388
      %v1477 = vsub.f32 %v1335, %v1425
      %v1478 = vsub.f32 %v1249, %v1388
      %v1479 = vsub.f32 %v1338, %v1425
      %v1480 = vsub.f32 %v1251, %v1388
      %v1481 = vsub.f32 %v1340, %v1425
      %v1482 = vsub.f32 %v1254, %v1388
      %v1483 = vsub.f32 %v1343, %v1425
      %v1484 = vsub.f32 %v1256, %v1388
      %v1485 = vsub.f32 %v1345, %v1425
      %v1486 = vsub.f32 %v1259, %v1388
      %v1487 = vsub.f32 %v1348, %v1425
      %v1488 = vsub.f32 %v1261, %v1388
      %v1489 = vsub.f32 %v1350, %v1425
      %v1490 = vmul.f32 %v1426, 1.442695
      %v1491 = vpow.pop %v1490
      %v1492 = vmul.f32 %v1427, 1.442695
      %v1493 = vpow.pop %v1492
      %v1494 = vmul.f32 %v1428, 1.442695
      %v1495 = vpow.pop %v1494
      %v1496 = vmul.f32 %v1429, 1.442695
      %v1497 = vpow.pop %v1496
      %v1498 = vmul.f32 %v1430, 1.442695
      %v1499 = vpow.pop %v1498
      %v1500 = vmul.f32 %v1431, 1.442695
      %v1501 = vpow.pop %v1500
      %v1502 = vmul.f32 %v1432, 1.442695
      %v1503 = vpow.pop %v1502
      %v1504 = vmul.f32 %v1433, 1.442695
      %v1505 = vpow.pop %v1504
      %v1506 = vmul.f32 %v1434, 1.442695
      %v1507 = vpow.pop %v1506
      %v1508 = vmul.f32 %v1435, 1.442695
      %v1509 = vpow.pop %v1508
      %v1510 = vmul.f32 %v1436, 1.442695
      %v1511 = vpow.pop %v1510
      %v1512 = vmul.f32 %v1437, 1.442695
      %v1513 = vpow.pop %v1512
      %v1514 = vmul.f32 %v1438, 1.442695
      %v1515 = vpow.pop %v1514
      %v1516 = vmul.f32 %v1439, 1.442695
      %v1517 = vpow.pop %v1516
      %v1518 = vmul.f32 %v1440, 1.442695
      %v1519 = vpow.pop %v1518
      %v1520 = vmul.f32 %v1441, 1.442695
      %v1521 = vpow.pop %v1520
      %v1522 = vmul.f32 %v1442, 1.442695
      %v1523 = vpow.pop %v1522
      %v1524 = vmul.f32 %v1443, 1.442695
      %v1525 = vpow.pop %v1524
      %v1526 = vmul.f32 %v1444, 1.442695
      %v1527 = vpow.pop %v1526
      %v1528 = vmul.f32 %v1445, 1.442695
      %v1529 = vpow.pop %v1528
      %v1530 = vmul.f32 %v1446, 1.442695
      %v1531 = vpow.pop %v1530
      %v1532 = vmul.f32 %v1447, 1.442695
      %v1533 = vpow.pop %v1532
      %v1534 = vmul.f32 %v1448, 1.442695
      %v1535 = vpow.pop %v1534
      %v1536 = vmul.f32 %v1449, 1.442695
      %v1537 = vpow.pop %v1536
      %v1538 = vmul.f32 %v1450, 1.442695
      %v1539 = vpow.pop %v1538
      %v1540 = vmul.f32 %v1451, 1.442695
      %v1541 = vpow.pop %v1540
      %v1542 = vmul.f32 %v1452, 1.442695
      %v1543 = vpow.pop %v1542
      %v1544 = vmul.f32 %v1453, 1.442695
      %v1545 = vpow.pop %v1544
      %v1546 = vmul.f32 %v1454, 1.442695
      %v1547 = vpow.pop %v1546
      %v1548 = vmul.f32 %v1455, 1.442695
      %v1549 = vpow.pop %v1548
      %v1550 = vmul.f32 %v1456, 1.442695
      %v1551 = vpow.pop %v1550
      %v1552 = vmul.f32 %v1457, 1.442695
      %v1553 = vpow.pop %v1552
      %v1554 = vmul.f32 %v1458, 1.442695
      %v1555 = vpow.pop %v1554
      %v1556 = vmul.f32 %v1459, 1.442695
      %v1557 = vpow.pop %v1556
      %v1558 = vmul.f32 %v1460, 1.442695
      %v1559 = vpow.pop %v1558
      %v1560 = vmul.f32 %v1461, 1.442695
      %v1561 = vpow.pop %v1560
      %v1562 = vmul.f32 %v1462, 1.442695
      %v1563 = vpow.pop %v1562
      %v1564 = vmul.f32 %v1463, 1.442695
      %v1565 = vpow.pop %v1564
      %v1566 = vmul.f32 %v1464, 1.442695
      %v1567 = vpow.pop %v1566
      %v1568 = vmul.f32 %v1465, 1.442695
      %v1569 = vpow.pop %v1568
      %v1570 = vmul.f32 %v1466, 1.442695
      %v1571 = vpow.pop %v1570
      %v1572 = vmul.f32 %v1467, 1.442695
      %v1573 = vpow.pop %v1572
      %v1574 = vmul.f32 %v1468, 1.442695
      %v1575 = vpow.pop %v1574
      %v1576 = vmul.f32 %v1469, 1.442695
      %v1577 = vpow.pop %v1576
      %v1578 = vmul.f32 %v1470, 1.442695
      %v1579 = vpow.pop %v1578
      %v1580 = vmul.f32 %v1471, 1.442695
      %v1581 = vpow.pop %v1580
      %v1582 = vmul.f32 %v1472, 1.442695
      %v1583 = vpow.pop %v1582
      %v1584 = vmul.f32 %v1473, 1.442695
      %v1585 = vpow.pop %v1584
      %v1586 = vmul.f32 %v1474, 1.442695
      %v1587 = vpow.pop %v1586
      %v1588 = vmul.f32 %v1475, 1.442695
      %v1589 = vpow.pop %v1588
      %v1590 = vmul.f32 %v1476, 1.442695
      %v1591 = vpow.pop %v1590
      %v1592 = vmul.f32 %v1477, 1.442695
      %v1593 = vpow.pop %v1592
      %v1594 = vmul.f32 %v1478, 1.442695
      %v1595 = vpow.pop %v1594
      %v1596 = vmul.f32 %v1479, 1.442695
      %v1597 = vpow.pop %v1596
      %v1598 = vmul.f32 %v1480, 1.442695
      %v1599 = vpow.pop %v1598
      %v1600 = vmul.f32 %v1481, 1.442695
      %v1601 = vpow.pop %v1600
      %v1602 = vmul.f32 %v1482, 1.442695
      %v1603 = vpow.pop %v1602
      %v1604 = vmul.f32 %v1483, 1.442695
      %v1605 = vpow.pop %v1604
      %v1606 = vmul.f32 %v1484, 1.442695
      %v1607 = vpow.pop %v1606
      %v1608 = vmul.f32 %v1485, 1.442695
      %v1609 = vpow.pop %v1608
      %v1610 = vmul.f32 %v1486, 1.442695
      %v1611 = vpow.pop %v1610
      %v1612 = vmul.f32 %v1487, 1.442695
      %v1613 = vpow.pop %v1612
      %v1614 = vmul.f32 %v1488, 1.442695
      %v1615 = vpow.pop %v1614
      %v1616 = vmul.f32 %v1489, 1.442695
      %v1617 = vpow.pop %v1616
      %v1618 = vadd.f32 %v1491, %v1495
      %v1619 = vadd.f32 %v1618, %v1499
      %v1620 = vadd.f32 %v1619, %v1503
      %v1621 = vadd.f32 %v1620, %v1507
      %v1622 = vadd.f32 %v1621, %v1511
      %v1623 = vadd.f32 %v1622, %v1515
      %v1624 = vadd.f32 %v1623, %v1519
      %v1625 = vadd.f32 %v1624, %v1523
      %v1626 = vadd.f32 %v1625, %v1527
      %v1627 = vadd.f32 %v1626, %v1531
      %v1628 = vadd.f32 %v1627, %v1535
      %v1629 = vadd.f32 %v1628, %v1539
      %v1630 = vadd.f32 %v1629, %v1543
      %v1631 = vadd.f32 %v1630, %v1547
      %v1632 = vadd.f32 %v1631, %v1551
      %v1633 = vadd.f32 %v1632, %v1555
      %v1634 = vadd.f32 %v1633, %v1559
      %v1635 = vadd.f32 %v1634, %v1563
      %v1636 = vadd.f32 %v1635, %v1567
      %v1637 = vadd.f32 %v1636, %v1571
      %v1638 = vadd.f32 %v1637, %v1575
      %v1639 = vadd.f32 %v1638, %v1579
      %v1640 = vadd.f32 %v1639, %v1583
      %v1641 = vadd.f32 %v1640, %v1587
      %v1642 = vadd.f32 %v1641, %v1591
      %v1643 = vadd.f32 %v1642, %v1595
      %v1644 = vadd.f32 %v1643, %v1599
      %v1645 = vadd.f32 %v1644, %v1603
      %v1646 = vadd.f32 %v1645, %v1607
      %v1647 = vadd.f32 %v1646, %v1611
      %v1648 = vadd.f32 %v1647, %v1615
      %v1649 = vrot.slane %v1648, 4
      %v1650 = vadd.f32 %v1648, %v1649
      %v1651 = vrot.slane %v1650, 2
      %v1652 = vadd.f32 %v1650, %v1651
      %v1653 = vrot.slane %v1652, 1
      %v1654 = vadd.f32 %v1652, %v1653
      %v1655 = vadd.f32 %v1493, %v1497
      %v1656 = vadd.f32 %v1655, %v1501
      %v1657 = vadd.f32 %v1656, %v1505
      %v1658 = vadd.f32 %v1657, %v1509
      %v1659 = vadd.f32 %v1658, %v1513
      %v1660 = vadd.f32 %v1659, %v1517
      %v1661 = vadd.f32 %v1660, %v1521
      %v1662 = vadd.f32 %v1661, %v1525
      %v1663 = vadd.f32 %v1662, %v1529
      %v1664 = vadd.f32 %v1663, %v1533
      %v1665 = vadd.f32 %v1664, %v1537
      %v1666 = vadd.f32 %v1665, %v1541
      %v1667 = vadd.f32 %v1666, %v1545
      %v1668 = vadd.f32 %v1667, %v1549
      %v1669 = vadd.f32 %v1668, %v1553
      %v1670 = vadd.f32 %v1669, %v1557
      %v1671 = vadd.f32 %v1670, %v1561
      %v1672 = vadd.f32 %v1671, %v1565
      %v1673 = vadd.f32 %v1672, %v1569
      %v1674 = vadd.f32 %v1673, %v1573
      %v1675 = vadd.f32 %v1674, %v1577
      %v1676 = vadd.f32 %v1675, %v1581
      %v1677 = vadd.f32 %v1676, %v1585
      %v1678 = vadd.f32 %v1677, %v1589
      %v1679 = vadd.f32 %v1678, %v1593
      %v1680 = vadd.f32 %v1679, %v1597
      %v1681 = vadd.f32 %v1680, %v1601
      %v1682 = vadd.f32 %v1681, %v1605
      %v1683 = vadd.f32 %v1682, %v1609
      %v1684 = vadd.f32 %v1683, %v1613
      %v1685 = vadd.f32 %v1684, %v1617
      %v1686 = vrot.slane %v1685, 4
      %v1687 = vadd.f32 %v1685, %v1686
      %v1688 = vrot.slane %v1687, 2
      %v1689 = vadd.f32 %v1687, %v1688
      %v1690 = vrot.slane %v1689, 1
      %v1691 = vadd.f32 %v1689, %v1690
      %v1692 = vrcp.pop %v1654
      %v1693 = vrcp.pop %v1691
      %v1694 = vmul.f32 %v1692, 0.11111111
      %v1695 = vmul.f32 %v1693, 0.11111111
      %v1696 = vpack.c.bf16 %v1029, %v1027
      %v1697 = vpack.c.bf16 %v1030, %v1028
      %v1698 = vpack.c.bf16 %v1033, %v1031
      %v1699 = vpack.c.bf16 %v1034, %v1032
      %v1700 = vpack.c.bf16 %v1037, %v1035
      %v1701 = vpack.c.bf16 %v1038, %v1036
      %v1702 = vpack.c.bf16 %v1495, %v1491
      %v1703 = vpack.c.bf16 %v1497, %v1493
      %v1704 = vpack.c.bf16 %v1503, %v1499
      %v1705 = vpack.c.bf16 %v1505, %v1501
      %v1706 = vpack.c.bf16 %v1511, %v1507
      %v1707 = vpack.c.bf16 %v1513, %v1509
      %v1708 = vpack.c.bf16 %v1519, %v1515
      %v1709 = vpack.c.bf16 %v1521, %v1517
      %v1710 = vpack.c.bf16 %v1527, %v1523
      %v1711 = vpack.c.bf16 %v1529, %v1525
      %v1712 = vpack.c.bf16 %v1535, %v1531
      %v1713 = vpack.c.bf16 %v1537, %v1533
      %v1714 = vpack.c.bf16 %v1543, %v1539
      %v1715 = vpack.c.bf16 %v1545, %v1541
      %v1716 = vpack.c.bf16 %v1551, %v1547
      %v1717 = vpack.c.bf16 %v1553, %v1549
      %v1718 = vpack.c.bf16 %v1559, %v1555
      %v1719 = vpack.c.bf16 %v1561, %v1557
      %v1720 = vpack.c.bf16 %v1567, %v1563
      %v1721 = vpack.c.bf16 %v1569, %v1565
      %v1722 = vpack.c.bf16 %v1575, %v1571
      %v1723 = vpack.c.bf16 %v1577, %v1573
      %v1724 = vpack.c.bf16 %v1583, %v1579
      %v1725 = vpack.c.bf16 %v1585, %v1581
      %v1726 = vpack.c.bf16 %v1591, %v1587
      %v1727 = vpack.c.bf16 %v1593, %v1589
      %v1728 = vpack.c.bf16 %v1599, %v1595
      %v1729 = vpack.c.bf16 %v1601, %v1597
      %v1730 = vpack.c.bf16 %v1607, %v1603
      %v1731 = vpack.c.bf16 %v1609, %v1605
      %v1732 = vpack.c.bf16 %v1615, %v1611
      %v1733 = vpack.c.bf16 %v1617, %v1613
      %1734 = vmatpush.bf16.msra.mxu0 %v1716
      %1735 = vmatpush.bf16.msra.mxu0 %v1714
      %1736 = vmatpush.bf16.msra.mxu0 %v1712
      %1737 = vmatpush.bf16.msra.mxu0 %v1710
      %1738 = vmatpush.bf16.msra.mxu0 %v1708
      %1739 = vmatpush.bf16.msra.mxu0 %v1706
      %1740 = vmatpush.bf16.msra.mxu0 %v1704
      %1741 = vmatpush.bf16.msra.mxu0 %v1702
      %1742 = vmatmul.bf16.gmra.mxu0 %v1696
      %v1743 = vpop.f32.mrf.mxu0
      %v1744 = vadd.f32 0.0, %v1743
      %v1745 = vpop.f32.mrf.mxu0
      %v1746 = vadd.f32 0.0, %v1745
      %1747 = vmatmul.bf16.gmra.mxu0 %v1698
      %v1748 = vpop.f32.mrf.mxu0
      %v1749 = vadd.f32 0.0, %v1748
      %v1750 = vpop.f32.mrf.mxu0
      %v1751 = vadd.f32 0.0, %v1750
      %1752 = vmatmul.bf16.gmra.mxu0 %v1700
      %v1753 = vpop.f32.mrf.mxu0
      %v1754 = vadd.f32 0.0, %v1753
      %v1755 = vpop.f32.mrf.mxu0
      %1756 = vdwg.mxu0
      %1757 = vmatpush.bf16.msra.mxu0 %v1732
      %1758 = vmatpush.bf16.msra.mxu0 %v1730
      %1759 = vmatpush.bf16.msra.mxu0 %v1728
      %1760 = vmatpush.bf16.msra.mxu0 %v1726
      %1761 = vmatpush.bf16.msra.mxu0 %v1724
      %1762 = vmatpush.bf16.msra.mxu0 %v1722
      %1763 = vmatpush.bf16.msra.mxu0 %v1720
      %1764 = vmatpush.bf16.msra.mxu0 %v1718
      %1765 = vmatmul.bf16.gmra.mxu0 %v1697
      %v1766 = vpop.f32.mrf.mxu0
      %v1767 = vadd.f32 %v1744, %v1766
      %v1768 = vpop.f32.mrf.mxu0
      %v1769 = vadd.f32 %v1746, %v1768
      %1770 = vmatmul.bf16.gmra.mxu0 %v1699
      %v1771 = vpop.f32.mrf.mxu0
      %v1772 = vadd.f32 %v1749, %v1771
      %v1773 = vpop.f32.mrf.mxu0
      %v1774 = vadd.f32 %v1751, %v1773
      %1775 = vmatmul.bf16.gmra.mxu0 %v1701
      %v1776 = vpop.f32.mrf.mxu0
      %v1777 = vadd.f32 %v1754, %v1776
      %v1778 = vpop.f32.mrf.mxu0
      %1779 = vdwg.mxu0
      %1780 = vmatpush.bf16.msra.mxu0 %v1717
      %1781 = vmatpush.bf16.msra.mxu0 %v1715
      %1782 = vmatpush.bf16.msra.mxu0 %v1713
      %1783 = vmatpush.bf16.msra.mxu0 %v1711
      %1784 = vmatpush.bf16.msra.mxu0 %v1709
      %1785 = vmatpush.bf16.msra.mxu0 %v1707
      %1786 = vmatpush.bf16.msra.mxu0 %v1705
      %1787 = vmatpush.bf16.msra.mxu0 %v1703
      %1788 = vmatmul.bf16.gmra.mxu0 %v1696
      %v1789 = vpop.f32.mrf.mxu0
      %v1790 = vadd.f32 0.0, %v1789
      %v1791 = vpop.f32.mrf.mxu0
      %v1792 = vadd.f32 0.0, %v1791
      %1793 = vmatmul.bf16.gmra.mxu0 %v1698
      %v1794 = vpop.f32.mrf.mxu0
      %v1795 = vadd.f32 0.0, %v1794
      %v1796 = vpop.f32.mrf.mxu0
      %v1797 = vadd.f32 0.0, %v1796
      %1798 = vmatmul.bf16.gmra.mxu0 %v1700
      %v1799 = vpop.f32.mrf.mxu0
      %v1800 = vadd.f32 0.0, %v1799
      %v1801 = vpop.f32.mrf.mxu0
      %1802 = vdwg.mxu0
      %1803 = vmatpush.bf16.msra.mxu0 %v1733
      %1804 = vmatpush.bf16.msra.mxu0 %v1731
      %1805 = vmatpush.bf16.msra.mxu0 %v1729
      %1806 = vmatpush.bf16.msra.mxu0 %v1727
      %1807 = vmatpush.bf16.msra.mxu0 %v1725
      %1808 = vmatpush.bf16.msra.mxu0 %v1723
      %1809 = vmatpush.bf16.msra.mxu0 %v1721
      %1810 = vmatpush.bf16.msra.mxu0 %v1719
      %1811 = vmatmul.bf16.gmra.mxu0 %v1697
      %v1812 = vpop.f32.mrf.mxu0
      %v1813 = vadd.f32 %v1790, %v1812
      %v1814 = vpop.f32.mrf.mxu0
      %v1815 = vadd.f32 %v1792, %v1814
      %1816 = vmatmul.bf16.gmra.mxu0 %v1699
      %v1817 = vpop.f32.mrf.mxu0
      %v1818 = vadd.f32 %v1795, %v1817
      %v1819 = vpop.f32.mrf.mxu0
      %v1820 = vadd.f32 %v1797, %v1819
      %1821 = vmatmul.bf16.gmra.mxu0 %v1701
      %v1822 = vpop.f32.mrf.mxu0
      %v1823 = vadd.f32 %v1800, %v1822
      %v1824 = vpop.f32.mrf.mxu0
      %1825 = vdwg.mxu0
      %v1826 = vmul.f32 %v1767, %v1694
      %v1827 = vmul.f32 %v1813, %v1695
      %v1828 = vmul.f32 %v1769, %v1694
      %v1829 = vmul.f32 %v1815, %v1695
      %v1830 = vmul.f32 %v1772, %v1694
      %v1831 = vmul.f32 %v1818, %v1695
      %v1832 = vmul.f32 %v1774, %v1694
      %v1833 = vmul.f32 %v1820, %v1695
      %v1834 = vmul.f32 %v1777, %v1694
      %v1835 = vmul.f32 %v1823, %v1695
      %1836 = vrot.lane.b32.xlu0 %v1826, 111
      %v1837 = vpop.permute.xlu0 %1836
      %1838 = vrot.lane.b32.xlu0 %v1827, 111
      %v1839 = vpop.permute.xlu0 %1838
      %v1840 = vsel %vm678, %v1837, %v1839
      %v1841 = vsel %vm678, %v1839, %v1837
      %v1842 = vmul.f32 %v1840, %v697
      %v1843 = vmul.f32 %v1841, %v698
      %v1844 = vadd.f32 %v1842, 0.0
      %v1845 = vadd.f32 %v1843, 0.0
      %v1848 = vrot.slane %v1826, 4
      %v1849 = vrot.slane %v1827, 4
      %1852 = vrot.lane.b32.xlu0 %v1848, 112
      %v1853 = vpop.permute.xlu0 %1852
      %1854 = vrot.lane.b32.xlu0 %v1849, 112
      %v1855 = vpop.permute.xlu0 %1854
      %v1856 = vsel %vm626, %v1853, %v1855
      %v1857 = vsel %vm626, %v1855, %v1853
      %v1858 = vmul.f32 %v1856, %v645
      %v1859 = vmul.f32 %v1857, %v646
      %v1860 = vadd.f32 %v1844, %v1858
      %v1861 = vadd.f32 %v1845, %v1859
      %1862 = vrot.lane.b32.xlu0 %v1828, 113
      %v1863 = vpop.permute.xlu0 %1862
      %1864 = vrot.lane.b32.xlu0 %v1829, 113
      %v1865 = vpop.permute.xlu0 %1864
      %v1866 = vsel %vm586, %v1863, %v1865
      %v1867 = vsel %vm586, %v1865, %v1863
      %v1868 = vmul.f32 %v1866, %v605
      %v1869 = vmul.f32 %v1867, %v606
      %v1870 = vadd.f32 %v1860, %v1868
      %v1871 = vadd.f32 %v1861, %v1869
      %v1874 = vrot.slane %v1828, 4
      %v1875 = vrot.slane %v1829, 4
      %1878 = vrot.lane.b32.xlu0 %v1874, 127
      %v1879 = vpop.permute.xlu0 %1878
      %1880 = vrot.lane.b32.xlu0 %v1875, 127
      %v1881 = vpop.permute.xlu0 %1880
      %v1882 = vsel %vm534, %v1879, %v1881
      %v1883 = vsel %vm534, %v1881, %v1879
      %v1884 = vmul.f32 %v1882, %v553
      %v1885 = vmul.f32 %v1883, %v554
      %v1886 = vadd.f32 %v1870, %v1884
      %v1887 = vadd.f32 %v1871, %v1885
      %v1888 = vadd.f32 %v1886, %v1830
      %v1889 = vadd.f32 %v1887, %v1831
      %v1892 = vrot.slane %v1830, 4
      %v1893 = vrot.slane %v1831, 4
      %1896 = vrot.lane.b32.xlu0 %v1892, 1
      %v1897 = vpop.permute.xlu0 %1896
      %1898 = vrot.lane.b32.xlu0 %v1893, 1
      %v1899 = vpop.permute.xlu0 %1898
      %v1900 = vsel %vm451, %v1897, %v1899
      %v1901 = vsel %vm451, %v1899, %v1897
      %v1902 = vmul.f32 %v1901, %v470
      %v1903 = vmul.f32 %v1900, %v471
      %v1904 = vadd.f32 %v1888, %v1902
      %v1905 = vadd.f32 %v1889, %v1903
      %1906 = vrot.lane.b32.xlu0 %v1832, 15
      %v1907 = vpop.permute.xlu0 %1906
      %1908 = vrot.lane.b32.xlu0 %v1833, 15
      %v1909 = vpop.permute.xlu0 %1908
      %v1910 = vsel %vm411, %v1907, %v1909
      %v1911 = vsel %vm411, %v1909, %v1907
      %v1912 = vmul.f32 %v1911, %v430
      %v1913 = vmul.f32 %v1910, %v431
      %v1914 = vadd.f32 %v1904, %v1912
      %v1915 = vadd.f32 %v1905, %v1913
      %v1918 = vrot.slane %v1832, 4
      %v1919 = vrot.slane %v1833, 4
      %1922 = vrot.lane.b32.xlu0 %v1918, 16
      %v1923 = vpop.permute.xlu0 %1922
      %1924 = vrot.lane.b32.xlu0 %v1919, 16
      %v1925 = vpop.permute.xlu0 %1924
      %v1926 = vsel %vm359, %v1923, %v1925
      %v1927 = vsel %vm359, %v1925, %v1923
      %v1928 = vmul.f32 %v1927, %v378
      %v1929 = vmul.f32 %v1926, %v379
      %v1930 = vadd.f32 %v1914, %v1928
      %v1931 = vadd.f32 %v1915, %v1929
      %1932 = vrot.lane.b32.xlu0 %v1834, 17
      %v1933 = vpop.permute.xlu0 %1932
      %1934 = vrot.lane.b32.xlu0 %v1835, 17
      %v1935 = vpop.permute.xlu0 %1934
      %v1936 = vsel %vm318, %v1933, %v1935
      %v1937 = vsel %vm318, %v1935, %v1933
      %v1938 = vmul.f32 %v1937, %v338
      %v1939 = vmul.f32 %v1936, %v339
      %v1940 = vadd.f32 %v1930, %v1938
      %v1941 = vadd.f32 %v1931, %v1939
      %v1942 = vsub.f32 1.0, %v217
      %v1944 = vperm.slane %v1942, 0
      %v1945 = vperm.slane %v1942, 1
      %v1948 = vmul.f32 %v1940, %v1944
      %v1949 = vmul.f32 %v1941, %v1945
      %1950 = vst [vmem:[#allocation1] ss:$2 sm:$0xff] %v226
      %v1951 = vld.sshfl [vmem:[#allocation1] sm:$0xff pattern:$0x75316420]
      %v1952 = vld.sshfl [vmem:[#allocation1 + $0x8] sm:$0xff pattern:$0x75316420]
      %v1955 = vadd.f32 %v1948, %v1951
      %v1956 = vadd.f32 %v1949, %v1952
      %v1957 = vld [vmem:[%s3] sm:$0xff]
      %v1958 = vld [vmem:[%s3 + $0x8] sm:$0x1f]
      %v1959 = vsel %vm223, %v1955, 0.0
      %v1960 = vsel %vm223, %v1956, 0.0
      %v1961 = vadd.f32 %v1959, %v1960
      %1962 = vadd.xlane.f32.xlu0 %v1961
      %v1963 = vpop.xlane.xlu0 %1962
      %v1964 = vrcp.pop 256.0
      %v1965 = vmul.f32 256.0, %v1964
      %v1966 = vsub.f32 1.0, %v1965
      %v1967 = vmul.f32 %v1964, %v1966
      %v1968 = vadd.f32 %v1964, %v1967
      %vm1969 = vweird.f32 %v1964
      %v1970 = vsel %vm1969, %v1964, %v1968
      %v1971 = vmul.f32 %v1963, %v1970
      %v1972 = vmul.f32 %v1957, %v1971
      %vm1973 = vcmask 27648
      %v1974 = vsel %vm1973, %v1972, 0.0
      %v1975 = vrot.slane %v1974, 4
      %v1976 = vadd.f32 %v1974, %v1975
      %v1977 = vrot.slane %v1976, 2
      %v1978 = vadd.f32 %v1976, %v1977
      %v1979 = vrot.slane %v1978, 1
      %v1980 = vadd.f32 %v1978, %v1979
      %v1981 = vadd.f32 %v1980, %v1958
      %v1982 = vmax.f32 %v1981, 0.0
      %v1983 = vperm.slane %v1982, 4
      %v1984 = vmul.f32 %v1957, %v1983
      %vm1985 = vcmask 31748
      %v1986 = vsel %vm1985, %v1984, 0.0
      %1987 = vadd.xlane.f32.xlu0 %v1986
      %v1988 = vpop.xlane.xlu0 %1987
      %v1989 = vadd.f32 %v1988, %v1957
      %v1990 = vxor.u32 %v1989, 2147483648
      %v1991 = vmul.f32 %v1990, 1.442695
      %v1992 = vpow.pop %v1991
      %v1993 = vadd.f32 %v1992, 1.0
      %v1994 = vrcp.pop %v1993
      %v1995 = vmul.f32 %v1993, %v1994
      %v1996 = vsub.f32 1.0, %v1995
      %v1997 = vmul.f32 %v1994, %v1996
      %v1998 = vadd.f32 %v1994, %v1997
      %vm1999 = vweird.f32 %v1993
      %vm2000 = vweird.f32 %v1994
      %vm2001 = vmor %vm1999, %vm2000
      %v2002 = vsel %vm2001, %v1994, %v1998
      %v2003 = vand.u32 2147483647, %v1993
      %vm2004 = vcmp.eq.f32.partialorder %v2003, 8.507059e+37
      %v2005 = vand.u32 %v1993, 2147483648
      %v2006 = vor.u32 1.1754944e-38, %v2005
      %v2007 = vsel %vm2004, %v2006, %v2002
      %v2008 = vmul.f32 1.0, %v2007
      %2010 = vset.pattern.permute.xlu0 4
      %2011 = vperm.xlu0 %2010, %v2008
      %v2012 = vpop.permute.xlu0 %2011
      %v2013 = vrot.slane %v2012, 4
      %v2015 = vmul.f32 %v1955, %v2013
      %v2016 = vmul.f32 %v1956, %v2013
      %2018 = vset.pattern.permute.xlu0 0
      %2019 = vperm.xlu0 %2018, %v1958
      %v2020 = vpop.permute.xlu0 %2019
      %v2022 = vperm.slane %v2015, 0
      %v2023 = vperm.slane %v2016, 0
      %v2024 = vmul.f32 %v2020, %v2022
      %v2025 = vmul.f32 %v2020, %v2023
      %v2026 = vadd.f32 %v2024, 0.0
      %v2027 = vadd.f32 %v2025, 0.0
      %2028 = vset.pattern.permute.xlu0 1
      %2029 = vperm.xlu0 %2028, %v1958
      %v2030 = vpop.permute.xlu0 %2029
      %v2032 = vperm.slane %v2015, 1
      %v2033 = vperm.slane %v2016, 1
      %v2034 = vmul.f32 %v2030, %v2032
      %v2035 = vmul.f32 %v2030, %v2033
      %v2036 = vadd.f32 %v2026, %v2034
      %v2037 = vadd.f32 %v2027, %v2035
      %2038 = vset.pattern.permute.xlu0 2
      %2039 = vperm.xlu0 %2038, %v1958
      %v2040 = vpop.permute.xlu0 %2039
      %v2042 = vperm.slane %v2015, 2
      %v2043 = vperm.slane %v2016, 2
      %v2044 = vmul.f32 %v2040, %v2042
      %v2045 = vmul.f32 %v2040, %v2043
      %v2046 = vadd.f32 %v2036, %v2044
      %v2047 = vadd.f32 %v2037, %v2045
      %2048 = vset.pattern.permute.xlu0 3
      %2049 = vperm.xlu0 %2048, %v1958
      %v2050 = vpop.permute.xlu0 %2049
      %v2052 = vperm.slane %v2015, 3
      %v2053 = vperm.slane %v2016, 3
      %v2054 = vmul.f32 %v2050, %v2052
      %v2055 = vmul.f32 %v2050, %v2053
      %v2056 = vadd.f32 %v2046, %v2054
      %v2057 = vadd.f32 %v2047, %v2055
      %2058 = vset.pattern.permute.xlu0 4
      %2059 = vperm.xlu0 %2058, %v1958
      %v2060 = vpop.permute.xlu0 %2059
      %v2062 = vadd.f32 %v2056, %v2060
      %v2063 = vadd.f32 %v2057, %v2060
      %v2066 = vrot.slane %v2063, 4
      %v2067 = vsel %vm223, %v2062, %v2066
      %2069 = vst [vmem:[%s214] sm:$0xff] %v2067
      %p2070 = scmp.lt.s32.totalorder %s15, 1
      %s2071 = scalar_select %p2070, %s15, 1
      %s2072 = smul.addr %s2071, 2
      %s2073 = smul.addr %s2072, 4
      %s2074 = scalar_lea.vmem %s4, %s2073
      // Predicated region
      $region37: #{_lambda_.1} parent=35 // pred_check
        %p2075 = pneg %p127
      $region38: #{_lambda_.1} parent=35 // pred_check_branch
        %2077 = sbr.rel (%p2075) target = $region40
      $region39: #{_lambda_.1} parent=35 // pred_region
        _
      $region40: #{_lambda_.1} parent=35 // pred_fallthru
        _
    $region36: #{_lambda_.1} parent=5 // pred_fallthru
      _
    %p2078 = scmp.le.s32.totalorder 2, %s10
    // Predicated region
    $region41: #{_lambda_.1} parent=5 // pred_check
      %p2079 = pneg %p2078
    $region42: #{_lambda_.1} parent=5 // pred_check_branch
      %2081 = sbr.rel (%p2079) target = $region44
    $region43: #{_lambda_.1} parent=5 // pred_region
      %s2082 = ssub.s32 %s10, 2
      // Predicated region
      $region45: #{_lambda_.1} parent=43 // pred_check
        %p2083 = pneg %p133
      $region46: #{_lambda_.1} parent=43 // pred_check_branch
        %2085 = sbr.rel (%p2083) target = $region48
      $region47: #{_lambda_.1} parent=43 // pred_region
        %p2086 = scmp.lt.s32.totalorder %s16, 1
        %s2087 = scalar_select %p2086, %s16, 1
        %s2088 = smul.addr %s2087, 2
        %s2089 = smul.addr %s2088, 4
        %s2090 = scalar_lea.vmem %s4, %s2089
      $region48: #{_lambda_.1} parent=43 // pred_fallthru
        _
    $region44: #{_lambda_.1} parent=5 // pred_fallthru
      _
  $region6: #{_lambda_.1} parent=0 // loop_footer
    %s14 = sadd.s32 1, %s10
  $region7: #{_lambda_.1} parent=0 // loop_footer_branch
    %9 = sbr.rel target = $region3
  $region8: #{_lambda_.1} parent=0 // loop_exit
    _

</llo_original>
